<compile_context>
chip_gen: v7x
topology: tpu7x:2x2x1
jax: 0.10.0
libtpu: 0.0.40
codegen_flags: <defaults>
</compile_context>

<pallas_src>
import functools
import math

import jax
import jax.numpy as jnp
from jax.experimental import pallas as pl
from jax.experimental.pallas import tpu as pltpu


def _mha_kernel(x_ref, wq_ref, wk_ref, wv_ref, wo_ref,
                bq_ref, bk_ref, bv_ref, bo_ref,
                o_ref, attn_ref, *, num_heads):
    # One batch element per grid point.
    # x: (S, C) bf16, w*: (C, C) bf16, b*: (1, C) f32, o: (S, C) f32,
    # attn_ref: (S, C) f32 VMEM scratch holding concatenated head outputs.
    S, C = x_ref.shape
    D = C // num_heads
    scale = 1.0 / math.sqrt(D)

    x = x_ref[...]  # bf16

    # Fused all-head 1x1-conv projections: one C-wide MXU matmul each, f32 accumulate.
    q = (jnp.dot(x, wq_ref[...], preferred_element_type=jnp.float32)
         + bq_ref[...]) * scale          # scale folded into Q (O(S*C), not O(S*S))
    k = jnp.dot(x, wk_ref[...], preferred_element_type=jnp.float32) + bk_ref[...]
    v = (jnp.dot(x, wv_ref[...], preferred_element_type=jnp.float32)
         + bv_ref[...]).astype(jnp.bfloat16)

    # Contract the last (lane) axis of both operands: Q_h @ K_h^T without k.T.
    dn = (((1,), (1,)), ((), ()))

    for h in range(num_heads):           # static unroll over heads
        sl = slice(h * D, (h + 1) * D)
        q_h = q[:, sl]
        k_h = k[:, sl]
        v_h = v[:, sl]

        s = jax.lax.dot_general(q_h, k_h, dn, preferred_element_type=jnp.float32)
        s = s - jnp.max(s, axis=-1, keepdims=True)     # numerically stable softmax
        p = jnp.exp(s)
        denom = jnp.sum(p, axis=-1, keepdims=True)

        o_h = jnp.dot(p.astype(jnp.bfloat16), v_h,
                      preferred_element_type=jnp.float32)
        # Fold softmax normalization into the output (EUP reciprocal, O(S*D) muls).
        attn_ref[:, sl] = o_h * pl.reciprocal(denom, approx=True)

    # Fused output 1x1 conv: (S, C) @ (C, C) + bias, lane-dense store.
    o_ref[...] = (jnp.dot(attn_ref[...].astype(jnp.bfloat16), wo_ref[...],
                          preferred_element_type=jnp.float32)
                  + bo_ref[...]).astype(o_ref.dtype)


def _vmem_limit_bytes(S, C):
    bf, f32 = 2, 4
    need = (2 * S * C * bf              # x block, double-buffered (bf16)
            + 4 * 2 * C * C * bf        # four weight blocks, double-buffered (bf16)
            + 4 * 2 * C * f32           # four bias blocks
            + 2 * S * C * f32           # output block, double-buffered
            + S * C * f32               # attn scratch
            + 3 * S * C * f32           # q/k/v temporaries
            + S * S * f32)              # per-head score tile
    return int(min(max(4 * need, 4 << 20), 48 << 20))


def multi_head_attention(x, params, num_heads):
    B, C, Hh, W = x.shape
    D = C // num_heads
    assert D * num_heads == C, "in_channels must be divisible by num_heads"
    S = Hh * W

    # NCHW -> (B, S, C): channels on the lane (last) axis; bf16 MXU operands.
    x_bsc = jnp.transpose(x.reshape(B, C, S), (0, 2, 1)).astype(jnp.bfloat16)

    def w_t(w):   # (C_out, C_in) -> (C_in, C_out), pre-transposed for x @ w
        return jnp.transpose(w).astype(jnp.bfloat16)

    def b_row(b):  # (C,) -> (1, C)
        return b.reshape(1, C).astype(jnp.float32)

    x_spec = pl.BlockSpec((None, S, C), lambda b: (b, 0, 0))
    w_spec = pl.BlockSpec((C, C), lambda b: (0, 0))
    b_spec = pl.BlockSpec((1, C), lambda b: (0, 0))
    o_spec = pl.BlockSpec((None, S, C), lambda b: (b, 0, 0))

    kernel = functools.partial(_mha_kernel, num_heads=num_heads)

    out = pl.pallas_call(
        kernel,
        out_shape=jax.ShapeDtypeStruct((B, S, C), jnp.float32),
        grid_spec=pltpu.PrefetchScalarGridSpec(
            num_scalar_prefetch=0,
            grid=(B,),
            in_specs=[x_spec,
                      w_spec, w_spec, w_spec, w_spec,
                      b_spec, b_spec, b_spec, b_spec],
            out_specs=o_spec,
            scratch_shapes=[pltpu.VMEM((S, C), jnp.float32)]),
        compiler_params=pltpu.CompilerParams(
            dimension_semantics=("parallel",),
            vmem_limit_bytes=_vmem_limit_bytes(S, C)),
    )(x_bsc,
      w_t(params["wq"]), w_t(params["wk"]), w_t(params["wv"]), w_t(params["wo"]),
      b_row(params["bq"]), b_row(params["bk"]), b_row(params["bv"]), b_row(params["bo"]))

    # (B, S, C) -> (B, C, H, W); channel c = h*D + d matches the PyTorch
    # view/permute/contiguous/view combine exactly.
    return jnp.transpose(out, (0, 2, 1)).reshape(B, C, Hh, W)


def init_params(key, num_features):
    # Deterministic synthetic init matching the module's 1x1-conv shapes:
    # weights (C, C) (the trailing 1x1 is dropped), biases (C,).
    C = num_features
    ks = jax.random.split(key, 8)
    bound_w = math.sqrt(6.0 / (C + C))
    bound_b = 1.0 / math.sqrt(C)

    def u(k, shape, bound):
        return jax.random.uniform(k, shape, jnp.float32, -bound, bound)

    return dict(
        wq=u(ks[0], (C, C), bound_w), bq=u(ks[1], (C,), bound_b),
        wk=u(ks[2], (C, C), bound_w), bk=u(ks[3], (C,), bound_b),
        wv=u(ks[4], (C, C), bound_w), bv=u(ks[5], (C,), bound_b),
        wo=u(ks[6], (C, C), bound_w), bo=u(ks[7], (C,), bound_b),
    )


def reference(x, params, num_heads):
    # Pure-JAX f32 reference reproducing the PyTorch forward exactly.
    B, C, Hh, W = x.shape
    D = C // num_heads
    S = Hh * W

    def conv1x1(t, w, b):
        return jnp.einsum('oc,bchw->bohw', w, t) + b[None, :, None, None]

    q = conv1x1(x, params['wq'], params['bq'])
    k = conv1x1(x, params['wk'], params['bk'])
    v = conv1x1(x, params['wv'], params['bv'])

    def split(t):  # (B, C, H, W) -> (B*nh, S, D), matching view + permute
        t = t.reshape(B, num_heads, D, Hh, W)
        t = jnp.transpose(t, (0, 1, 3, 4, 2))
        return t.reshape(B * num_heads, S, D)

    q, k, v = split(q), split(k), split(v)
    e = jnp.einsum('bsd,btd->bst', q, k) / math.sqrt(D)
    p = jax.nn.softmax(e, axis=-1)
    o = jnp.einsum('bst,btd->bsd', p, v)
    o = o.reshape(B, num_heads, Hh, W, D)
    o = jnp.transpose(o, (0, 1, 4, 2, 3)).reshape(B, C, Hh, W)
    return conv1x1(o, params['wo'], params['bo'])


if __name__ == "__main__":
    B, C, Hh, W = 2, 32, 8, 8
    num_heads = 4

    root = jax.random.PRNGKey(0)
    kx, kp = jax.random.split(root, 2)
    x = jax.random.normal(kx, (B, C, Hh, W), jnp.float32)
    params = init_params(kp, C)

    out = multi_head_attention(x, params, num_heads)
    out = jax.block_until_ready(out)

    ref = reference(x, params, num_heads)
    assert out.shape == (B, C, Hh, W)
    max_err = float(jnp.max(jnp.abs(out - ref)))
    # bf16 MXU operands + approx reciprocal -> relaxed tolerance vs f32 reference.
    assert jnp.allclose(out, ref, atol=5e-2, rtol=5e-2), (
        "max abs err = %f" % max_err)

    print("KERNEL_OK")
</pallas_src>

<mosaic_0001>
module attributes {stable_mosaic.version = 11 : i64} {
  func.func @_mha_kernel(%arg0: i32, %arg1: memref<1x64x32xbf16, #tpu.memory_space<vmem>>, %arg2: memref<32x32xbf16, #tpu.memory_space<vmem>>, %arg3: memref<32x32xbf16, #tpu.memory_space<vmem>>, %arg4: memref<32x32xbf16, #tpu.memory_space<vmem>>, %arg5: memref<32x32xbf16, #tpu.memory_space<vmem>>, %arg6: memref<1x32xf32, #tpu.memory_space<vmem>>, %arg7: memref<1x32xf32, #tpu.memory_space<vmem>>, %arg8: memref<1x32xf32, #tpu.memory_space<vmem>>, %arg9: memref<1x32xf32, #tpu.memory_space<vmem>>, %arg10: memref<1x64x32xf32, #tpu.memory_space<vmem>>, %arg11: memref<64x32xf32, #tpu.memory_space<vmem>>) attributes {dimension_semantics = [#tpu.dimension_semantics<parallel>], iteration_bounds = array<i64: 2>, scalar_prefetch = 0 : i64, scratch_operands = 1 : i64, tpu.core_type = #tpu.core_type<tc>, window_params = [{transform_indices = @transform_0, window_bounds = array<i64: 1, 64, 32>}, {pipeline_mode = #tpu.pipeline_mode<synchronous>, transform_indices = @transform_1, window_bounds = array<i64: 32, 32>}, {pipeline_mode = #tpu.pipeline_mode<synchronous>, transform_indices = @transform_2, window_bounds = array<i64: 32, 32>}, {pipeline_mode = #tpu.pipeline_mode<synchronous>, transform_indices = @transform_3, window_bounds = array<i64: 32, 32>}, {pipeline_mode = #tpu.pipeline_mode<synchronous>, transform_indices = @transform_4, window_bounds = array<i64: 32, 32>}, {pipeline_mode = #tpu.pipeline_mode<synchronous>, transform_indices = @transform_5, window_bounds = array<i64: 1, 32>}, {pipeline_mode = #tpu.pipeline_mode<synchronous>, transform_indices = @transform_6, window_bounds = array<i64: 1, 32>}, {pipeline_mode = #tpu.pipeline_mode<synchronous>, transform_indices = @transform_7, window_bounds = array<i64: 1, 32>}, {pipeline_mode = #tpu.pipeline_mode<synchronous>, transform_indices = @transform_8, window_bounds = array<i64: 1, 32>}, {transform_indices = @transform_9, window_bounds = array<i64: 1, 64, 32>}]} {
    %c0 = arith.constant 0 : index
    %c0_0 = arith.constant 0 : index
    %c0_1 = arith.constant 0 : index
    %0 = vector.load %arg1[%c0, %c0_0, %c0_1] : memref<1x64x32xbf16, #tpu.memory_space<vmem>>, vector<1x64x32xbf16>
    %1 = vector.shape_cast %0 : vector<1x64x32xbf16> to vector<64x32xbf16>
    %c0_2 = arith.constant 0 : index
    %c0_3 = arith.constant 0 : index
    %2 = vector.load %arg2[%c0_2, %c0_3] : memref<32x32xbf16, #tpu.memory_space<vmem>>, vector<32x32xbf16>
    %cst = arith.constant dense<0.000000e+00> : vector<64x32xf32>
    %3 = tpu.matmul %1, %2, %cst {dimension_numbers = #tpu.dot_dimension_numbers<[1], [0], [0], [1], [0, 0, 1, 1], [], []>} : vector<64x32xbf16>, vector<32x32xbf16>, vector<64x32xf32> -> vector<64x32xf32>
    %c0_4 = arith.constant 0 : index
    %c0_5 = arith.constant 0 : index
    %4 = vector.load %arg6[%c0_4, %c0_5] : memref<1x32xf32, #tpu.memory_space<vmem>>, vector<1x32xf32>
    %5 = vector.broadcast %4 : vector<1x32xf32> to vector<64x32xf32>
    %6 = arith.addf %3, %5 : vector<64x32xf32>
    %cst_6 = arith.constant 0.353553385 : f32
    %7 = vector.broadcast %cst_6 : f32 to vector<64x32xf32>
    %8 = arith.mulf %6, %7 : vector<64x32xf32>
    %c0_7 = arith.constant 0 : index
    %c0_8 = arith.constant 0 : index
    %9 = vector.load %arg3[%c0_7, %c0_8] : memref<32x32xbf16, #tpu.memory_space<vmem>>, vector<32x32xbf16>
    %cst_9 = arith.constant dense<0.000000e+00> : vector<64x32xf32>
    %10 = tpu.matmul %1, %9, %cst_9 {dimension_numbers = #tpu.dot_dimension_numbers<[1], [0], [0], [1], [0, 0, 1, 1], [], []>} : vector<64x32xbf16>, vector<32x32xbf16>, vector<64x32xf32> -> vector<64x32xf32>
    %c0_10 = arith.constant 0 : index
    %c0_11 = arith.constant 0 : index
    %11 = vector.load %arg7[%c0_10, %c0_11] : memref<1x32xf32, #tpu.memory_space<vmem>>, vector<1x32xf32>
    %12 = vector.broadcast %11 : vector<1x32xf32> to vector<64x32xf32>
    %13 = arith.addf %10, %12 : vector<64x32xf32>
    %c0_12 = arith.constant 0 : index
    %c0_13 = arith.constant 0 : index
    %14 = vector.load %arg4[%c0_12, %c0_13] : memref<32x32xbf16, #tpu.memory_space<vmem>>, vector<32x32xbf16>
    %cst_14 = arith.constant dense<0.000000e+00> : vector<64x32xf32>
    %15 = tpu.matmul %1, %14, %cst_14 {dimension_numbers = #tpu.dot_dimension_numbers<[1], [0], [0], [1], [0, 0, 1, 1], [], []>} : vector<64x32xbf16>, vector<32x32xbf16>, vector<64x32xf32> -> vector<64x32xf32>
    %c0_15 = arith.constant 0 : index
    %c0_16 = arith.constant 0 : index
    %16 = vector.load %arg8[%c0_15, %c0_16] : memref<1x32xf32, #tpu.memory_space<vmem>>, vector<1x32xf32>
    %17 = vector.broadcast %16 : vector<1x32xf32> to vector<64x32xf32>
    %18 = arith.addf %15, %17 : vector<64x32xf32>
    %19 = arith.truncf %18 : vector<64x32xf32> to vector<64x32xbf16>
    %20 = vector.extract_strided_slice %8 {offsets = [0, 0], sizes = [64, 8], strides = [1, 1]} : vector<64x32xf32> to vector<64x8xf32>
    %21 = vector.extract_strided_slice %13 {offsets = [0, 0], sizes = [64, 8], strides = [1, 1]} : vector<64x32xf32> to vector<64x8xf32>
    %22 = vector.extract_strided_slice %19 {offsets = [0, 0], sizes = [64, 8], strides = [1, 1]} : vector<64x32xbf16> to vector<64x8xbf16>
    %cst_17 = arith.constant dense<0.000000e+00> : vector<64x64xf32>
    %23 = tpu.matmul %20, %21, %cst_17 {dimension_numbers = #tpu.dot_dimension_numbers<[1], [1], [0], [0], [0, 0, 1, 0], [], []>} : vector<64x8xf32>, vector<64x8xf32>, vector<64x64xf32> -> vector<64x64xf32>
    %cst_18 = arith.constant dense<0xFF800000> : vector<64xf32>
    %24 = vector.multi_reduction <maximumf>, %23, %cst_18 [1] : vector<64x64xf32> to vector<64xf32>
    %25 = vector.shape_cast %24 : vector<64xf32> to vector<64x1xf32>
    %26 = vector.broadcast %25 : vector<64x1xf32> to vector<64x64xf32>
    %27 = arith.subf %23, %26 : vector<64x64xf32>
    %28 = math.exp %27 : vector<64x64xf32>
    %cst_19 = arith.constant dense<0.000000e+00> : vector<64xf32>
    %29 = vector.multi_reduction <add>, %28, %cst_19 [1] : vector<64x64xf32> to vector<64xf32>
    %30 = vector.shape_cast %29 : vector<64xf32> to vector<64x1xf32>
    %31 = arith.truncf %28 : vector<64x64xf32> to vector<64x64xbf16>
    %cst_20 = arith.constant dense<0.000000e+00> : vector<64x8xf32>
    %32 = tpu.matmul %31, %22, %cst_20 {dimension_numbers = #tpu.dot_dimension_numbers<[1], [0], [0], [1], [0, 0, 1, 1], [], []>} : vector<64x64xbf16>, vector<64x8xbf16>, vector<64x8xf32> -> vector<64x8xf32>
    %33 = tpu.reciprocal %30 {approx = true} : vector<64x1xf32> -> vector<64x1xf32>
    %34 = vector.broadcast %33 : vector<64x1xf32> to vector<64x8xf32>
    %35 = arith.mulf %32, %34 : vector<64x8xf32>
    %c0_21 = arith.constant 0 : index
    %c0_22 = arith.constant 0 : index
    %36 = vector.load %arg11[%c0_21, %c0_22] : memref<64x32xf32, #tpu.memory_space<vmem>>, vector<64x8xf32>
    tpu.vector_store %arg11[%c0_21, %c0_22], %35 {strides = array<i32>} : memref<64x32xf32, #tpu.memory_space<vmem>>, vector<64x8xf32>,
    %37 = vector.extract_strided_slice %8 {offsets = [0, 8], sizes = [64, 8], strides = [1, 1]} : vector<64x32xf32> to vector<64x8xf32>
    %38 = vector.extract_strided_slice %13 {offsets = [0, 8], sizes = [64, 8], strides = [1, 1]} : vector<64x32xf32> to vector<64x8xf32>
    %39 = vector.extract_strided_slice %19 {offsets = [0, 8], sizes = [64, 8], strides = [1, 1]} : vector<64x32xbf16> to vector<64x8xbf16>
    %cst_23 = arith.constant dense<0.000000e+00> : vector<64x64xf32>
    %40 = tpu.matmul %37, %38, %cst_23 {dimension_numbers = #tpu.dot_dimension_numbers<[1], [1], [0], [0], [0, 0, 1, 0], [], []>} : vector<64x8xf32>, vector<64x8xf32>, vector<64x64xf32> -> vector<64x64xf32>
    %cst_24 = arith.constant dense<0xFF800000> : vector<64xf32>
    %41 = vector.multi_reduction <maximumf>, %40, %cst_24 [1] : vector<64x64xf32> to vector<64xf32>
    %42 = vector.shape_cast %41 : vector<64xf32> to vector<64x1xf32>
    %43 = vector.broadcast %42 : vector<64x1xf32> to vector<64x64xf32>
    %44 = arith.subf %40, %43 : vector<64x64xf32>
    %45 = math.exp %44 : vector<64x64xf32>
    %cst_25 = arith.constant dense<0.000000e+00> : vector<64xf32>
    %46 = vector.multi_reduction <add>, %45, %cst_25 [1] : vector<64x64xf32> to vector<64xf32>
    %47 = vector.shape_cast %46 : vector<64xf32> to vector<64x1xf32>
    %48 = arith.truncf %45 : vector<64x64xf32> to vector<64x64xbf16>
    %cst_26 = arith.constant dense<0.000000e+00> : vector<64x8xf32>
    %49 = tpu.matmul %48, %39, %cst_26 {dimension_numbers = #tpu.dot_dimension_numbers<[1], [0], [0], [1], [0, 0, 1, 1], [], []>} : vector<64x64xbf16>, vector<64x8xbf16>, vector<64x8xf32> -> vector<64x8xf32>
    %50 = tpu.reciprocal %47 {approx = true} : vector<64x1xf32> -> vector<64x1xf32>
    %51 = vector.broadcast %50 : vector<64x1xf32> to vector<64x8xf32>
    %52 = arith.mulf %49, %51 : vector<64x8xf32>
    %c0_27 = arith.constant 0 : index
    %c8 = arith.constant 8 : index
    %53 = vector.load %arg11[%c0_27, %c8] : memref<64x32xf32, #tpu.memory_space<vmem>>, vector<64x8xf32>
    tpu.vector_store %arg11[%c0_27, %c8], %52 {strides = array<i32>} : memref<64x32xf32, #tpu.memory_space<vmem>>, vector<64x8xf32>,
    %54 = vector.extract_strided_slice %8 {offsets = [0, 16], sizes = [64, 8], strides = [1, 1]} : vector<64x32xf32> to vector<64x8xf32>
    %55 = vector.extract_strided_slice %13 {offsets = [0, 16], sizes = [64, 8], strides = [1, 1]} : vector<64x32xf32> to vector<64x8xf32>
    %56 = vector.extract_strided_slice %19 {offsets = [0, 16], sizes = [64, 8], strides = [1, 1]} : vector<64x32xbf16> to vector<64x8xbf16>
    %cst_28 = arith.constant dense<0.000000e+00> : vector<64x64xf32>
    %57 = tpu.matmul %54, %55, %cst_28 {dimension_numbers = #tpu.dot_dimension_numbers<[1], [1], [0], [0], [0, 0, 1, 0], [], []>} : vector<64x8xf32>, vector<64x8xf32>, vector<64x64xf32> -> vector<64x64xf32>
    %cst_29 = arith.constant dense<0xFF800000> : vector<64xf32>
    %58 = vector.multi_reduction <maximumf>, %57, %cst_29 [1] : vector<64x64xf32> to vector<64xf32>
    %59 = vector.shape_cast %58 : vector<64xf32> to vector<64x1xf32>
    %60 = vector.broadcast %59 : vector<64x1xf32> to vector<64x64xf32>
    %61 = arith.subf %57, %60 : vector<64x64xf32>
    %62 = math.exp %61 : vector<64x64xf32>
    %cst_30 = arith.constant dense<0.000000e+00> : vector<64xf32>
    %63 = vector.multi_reduction <add>, %62, %cst_30 [1] : vector<64x64xf32> to vector<64xf32>
    %64 = vector.shape_cast %63 : vector<64xf32> to vector<64x1xf32>
    %65 = arith.truncf %62 : vector<64x64xf32> to vector<64x64xbf16>
    %cst_31 = arith.constant dense<0.000000e+00> : vector<64x8xf32>
    %66 = tpu.matmul %65, %56, %cst_31 {dimension_numbers = #tpu.dot_dimension_numbers<[1], [0], [0], [1], [0, 0, 1, 1], [], []>} : vector<64x64xbf16>, vector<64x8xbf16>, vector<64x8xf32> -> vector<64x8xf32>
    %67 = tpu.reciprocal %64 {approx = true} : vector<64x1xf32> -> vector<64x1xf32>
    %68 = vector.broadcast %67 : vector<64x1xf32> to vector<64x8xf32>
    %69 = arith.mulf %66, %68 : vector<64x8xf32>
    %c0_32 = arith.constant 0 : index
    %c16 = arith.constant 16 : index
    %70 = vector.load %arg11[%c0_32, %c16] : memref<64x32xf32, #tpu.memory_space<vmem>>, vector<64x8xf32>
    tpu.vector_store %arg11[%c0_32, %c16], %69 {strides = array<i32>} : memref<64x32xf32, #tpu.memory_space<vmem>>, vector<64x8xf32>,
    %71 = vector.extract_strided_slice %8 {offsets = [0, 24], sizes = [64, 8], strides = [1, 1]} : vector<64x32xf32> to vector<64x8xf32>
    %72 = vector.extract_strided_slice %13 {offsets = [0, 24], sizes = [64, 8], strides = [1, 1]} : vector<64x32xf32> to vector<64x8xf32>
    %73 = vector.extract_strided_slice %19 {offsets = [0, 24], sizes = [64, 8], strides = [1, 1]} : vector<64x32xbf16> to vector<64x8xbf16>
    %cst_33 = arith.constant dense<0.000000e+00> : vector<64x64xf32>
    %74 = tpu.matmul %71, %72, %cst_33 {dimension_numbers = #tpu.dot_dimension_numbers<[1], [1], [0], [0], [0, 0, 1, 0], [], []>} : vector<64x8xf32>, vector<64x8xf32>, vector<64x64xf32> -> vector<64x64xf32>
    %cst_34 = arith.constant dense<0xFF800000> : vector<64xf32>
    %75 = vector.multi_reduction <maximumf>, %74, %cst_34 [1] : vector<64x64xf32> to vector<64xf32>
    %76 = vector.shape_cast %75 : vector<64xf32> to vector<64x1xf32>
    %77 = vector.broadcast %76 : vector<64x1xf32> to vector<64x64xf32>
    %78 = arith.subf %74, %77 : vector<64x64xf32>
    %79 = math.exp %78 : vector<64x64xf32>
    %cst_35 = arith.constant dense<0.000000e+00> : vector<64xf32>
    %80 = vector.multi_reduction <add>, %79, %cst_35 [1] : vector<64x64xf32> to vector<64xf32>
    %81 = vector.shape_cast %80 : vector<64xf32> to vector<64x1xf32>
    %82 = arith.truncf %79 : vector<64x64xf32> to vector<64x64xbf16>
    %cst_36 = arith.constant dense<0.000000e+00> : vector<64x8xf32>
    %83 = tpu.matmul %82, %73, %cst_36 {dimension_numbers = #tpu.dot_dimension_numbers<[1], [0], [0], [1], [0, 0, 1, 1], [], []>} : vector<64x64xbf16>, vector<64x8xbf16>, vector<64x8xf32> -> vector<64x8xf32>
    %84 = tpu.reciprocal %81 {approx = true} : vector<64x1xf32> -> vector<64x1xf32>
    %85 = vector.broadcast %84 : vector<64x1xf32> to vector<64x8xf32>
    %86 = arith.mulf %83, %85 : vector<64x8xf32>
    %c0_37 = arith.constant 0 : index
    %c24 = arith.constant 24 : index
    %87 = vector.load %arg11[%c0_37, %c24] : memref<64x32xf32, #tpu.memory_space<vmem>>, vector<64x8xf32>
    tpu.vector_store %arg11[%c0_37, %c24], %86 {strides = array<i32>} : memref<64x32xf32, #tpu.memory_space<vmem>>, vector<64x8xf32>,
    %c0_38 = arith.constant 0 : index
    %c0_39 = arith.constant 0 : index
    %88 = vector.load %arg11[%c0_38, %c0_39] : memref<64x32xf32, #tpu.memory_space<vmem>>, vector<64x32xf32>
    %89 = arith.truncf %88 : vector<64x32xf32> to vector<64x32xbf16>
    %c0_40 = arith.constant 0 : index
    %c0_41 = arith.constant 0 : index
    %90 = vector.load %arg5[%c0_40, %c0_41] : memref<32x32xbf16, #tpu.memory_space<vmem>>, vector<32x32xbf16>
    %cst_42 = arith.constant dense<0.000000e+00> : vector<64x32xf32>
    %91 = tpu.matmul %89, %90, %cst_42 {dimension_numbers = #tpu.dot_dimension_numbers<[1], [0], [0], [1], [0, 0, 1, 1], [], []>} : vector<64x32xbf16>, vector<32x32xbf16>, vector<64x32xf32> -> vector<64x32xf32>
    %c0_43 = arith.constant 0 : index
    %c0_44 = arith.constant 0 : index
    %92 = vector.load %arg9[%c0_43, %c0_44] : memref<1x32xf32, #tpu.memory_space<vmem>>, vector<1x32xf32>
    %93 = vector.broadcast %92 : vector<1x32xf32> to vector<64x32xf32>
    %94 = arith.addf %91, %93 : vector<64x32xf32>
    %c0_45 = arith.constant 0 : index
    %c0_46 = arith.constant 0 : index
    %c0_47 = arith.constant 0 : index
    %95 = vector.load %arg10[%c0_45, %c0_46, %c0_47] : memref<1x64x32xf32, #tpu.memory_space<vmem>>, vector<1x64x32xf32>
    %96 = vector.shape_cast %95 : vector<1x64x32xf32> to vector<64x32xf32>
    %97 = vector.shape_cast %94 : vector<64x32xf32> to vector<1x64x32xf32>
    tpu.vector_store %arg10[%c0_45, %c0_46, %c0_47], %97 {strides = array<i32>} : memref<1x64x32xf32, #tpu.memory_space<vmem>>, vector<1x64x32xf32>,
    return
  }
  func.func @transform_0(%arg0: i32) -> (i32, i32, i32) {
    %c0_i32 = arith.constant 0 : i32
    %c0_i32_0 = arith.constant 0 : i32
    %c0_i32_1 = arith.constant 0 : i32
    return %arg0, %c0_i32, %c0_i32_0 : i32, i32, i32
  }
  func.func @transform_1(%arg0: i32) -> (i32, i32) {
    %c0_i32 = arith.constant 0 : i32
    %c0_i32_0 = arith.constant 0 : i32
    %c0_i32_1 = arith.constant 0 : i32
    return %c0_i32, %c0_i32_0 : i32, i32
  }
  func.func @transform_2(%arg0: i32) -> (i32, i32) {
    %c0_i32 = arith.constant 0 : i32
    %c0_i32_0 = arith.constant 0 : i32
    %c0_i32_1 = arith.constant 0 : i32
    return %c0_i32, %c0_i32_0 : i32, i32
  }
  func.func @transform_3(%arg0: i32) -> (i32, i32) {
    %c0_i32 = arith.constant 0 : i32
    %c0_i32_0 = arith.constant 0 : i32
    %c0_i32_1 = arith.constant 0 : i32
    return %c0_i32, %c0_i32_0 : i32, i32
  }
  func.func @transform_4(%arg0: i32) -> (i32, i32) {
    %c0_i32 = arith.constant 0 : i32
    %c0_i32_0 = arith.constant 0 : i32
    %c0_i32_1 = arith.constant 0 : i32
    return %c0_i32, %c0_i32_0 : i32, i32
  }
  func.func @transform_5(%arg0: i32) -> (i32, i32) {
    %c0_i32 = arith.constant 0 : i32
    %c0_i32_0 = arith.constant 0 : i32
    %c0_i32_1 = arith.constant 0 : i32
    return %c0_i32, %c0_i32_0 : i32, i32
  }
  func.func @transform_6(%arg0: i32) -> (i32, i32) {
    %c0_i32 = arith.constant 0 : i32
    %c0_i32_0 = arith.constant 0 : i32
    %c0_i32_1 = arith.constant 0 : i32
    return %c0_i32, %c0_i32_0 : i32, i32
  }
  func.func @transform_7(%arg0: i32) -> (i32, i32) {
    %c0_i32 = arith.constant 0 : i32
    %c0_i32_0 = arith.constant 0 : i32
    %c0_i32_1 = arith.constant 0 : i32
    return %c0_i32, %c0_i32_0 : i32, i32
  }
  func.func @transform_8(%arg0: i32) -> (i32, i32) {
    %c0_i32 = arith.constant 0 : i32
    %c0_i32_0 = arith.constant 0 : i32
    %c0_i32_1 = arith.constant 0 : i32
    return %c0_i32, %c0_i32_0 : i32, i32
  }
  func.func @transform_9(%arg0: i32) -> (i32, i32, i32) {
    %c0_i32 = arith.constant 0 : i32
    %c0_i32_0 = arith.constant 0 : i32
    %c0_i32_1 = arith.constant 0 : i32
    return %arg0, %c0_i32, %c0_i32_0 : i32, i32, i32
  }
}

</mosaic_0001>

<llo_original>
// kernel: tpu_custom_call.1
$region0: #{tpu_custom_call.1}
  #allocation0 [shape = 'u32[]', space=smem, size = 0x4, offset = 0x4, fixed_abs, tag = 'smem constant byte address 0x4 - core index']
  #allocation1 [shape = 'u32[144,128]{1,0:T(1,128)}', space=vmem, size = 0x12000, scoped, tag = 'internal scratch']
  #allocation2 [shape = 'f32[64,32]{1,0:T(8,128)}', space=vmem, size = 0x8000, scoped, tag = 'scratch operand']
  %s0 = inlined_call_operand.vmem [shape: bf16[2,64,32], index: 0, kind: input, shape index: {}]
  %s1 = inlined_call_operand.vmem [shape: bf16[32,32], index: 1, kind: input, shape index: {}]
  %s2 = inlined_call_operand.vmem [shape: bf16[32,32], index: 2, kind: input, shape index: {}]
  %s3 = inlined_call_operand.vmem [shape: bf16[32,32], index: 3, kind: input, shape index: {}]
  %s4 = inlined_call_operand.vmem [shape: bf16[32,32], index: 4, kind: input, shape index: {}]
  %s5 = inlined_call_operand.vmem [shape: f32[1,32], index: 5, kind: input, shape index: {}]
  %s6 = inlined_call_operand.vmem [shape: f32[1,32], index: 6, kind: input, shape index: {}]
  %s7 = inlined_call_operand.vmem [shape: f32[1,32], index: 7, kind: input, shape index: {}]
  %s8 = inlined_call_operand.vmem [shape: f32[1,32], index: 8, kind: input, shape index: {}]
  %s9 = inlined_call_operand.vmem [shape: f32[2,64,32], index: 9, kind: output, shape index: {}]
  %s10 = sld [smem:[#allocation0]]
  $region69: #{tpu_custom_call.1} parent=0
    _
  %s12 = ssub.s32 1, %s10
  %s13 = scalar_select 0, %s12, %s10
  loop: start=0, step=1, limit=4
  $region2: #{tpu_custom_call.1} parent=0 // loop_pre_header
    _
  $region3: #{tpu_custom_call.1} parent=0 // loop_header
    %s15 = sphi 0, %s19
    %p16 = scmp.ge.s32.totalorder %s15, 4
    %s25 = sphi 0, %s27
    %s28 = sphi 0, %s25
    %s29 = sphi 0, %s28
    %s45 = sphi 0, %s29
    %s49 = sphi 0, %s49
    %s51 = sphi 0, %s49
    %s52 = sphi 0, %s51
    %s66 = sphi 0, %s52
    %s70 = sphi 0, %s70
    %s72 = sphi 0, %s70
    %s73 = sphi 0, %s72
    %s87 = sphi 0, %s73
    %s91 = sphi 0, %s91
    %s93 = sphi 0, %s91
    %s94 = sphi 0, %s93
    %s108 = sphi 0, %s94
    %s112 = sphi 0, %s112
    %s114 = sphi 0, %s112
    %s115 = sphi 0, %s114
    %s129 = sphi 0, %s115
    %s133 = sphi 0, %s133
    %s135 = sphi 0, %s133
    %s136 = sphi 0, %s135
    %s150 = sphi 0, %s136
    %s154 = sphi 0, %s154
    %s156 = sphi 0, %s154
    %s157 = sphi 0, %s156
    %s171 = sphi 0, %s157
    %s175 = sphi 0, %s175
    %s177 = sphi 0, %s175
    %s178 = sphi 0, %s177
    %s192 = sphi 0, %s178
    %s196 = sphi 0, %s196
    %s198 = sphi 0, %s196
    %s199 = sphi 0, %s198
    %s213 = sphi 0, %s199
    %s219 = sphi 0, %s221
    %s222 = sphi 0, %s219
    %s223 = sphi 0, %s222
    %s239 = sphi 0, %s223
  $region4: #{tpu_custom_call.1} parent=0 // loop_header_branch
    %18 = sbr.rel (%p16) target = $region8
  $region5: #{tpu_custom_call.1} parent=0 // loop_body
    %s20 = ssub.s32 %s15, 1
    %s21 = ssub.s32 %s15, 2
    %s22 = sadd.s32 %s15, 1
    %s23 = ssub.s32 %s15, %s22
    %p24 = scmp.eq.s32.totalorder %s23, 0
    %s26 = sadd.s32 %s25, 1
    %s27 = scalar_select %p24, %s25, %s26
    %p30 = pneg %p24
    %p31 = scmp.eq.s32.totalorder %s15, 1
    %p32 = por %p30, %p31
    %p33 = scmp.ne.s32.totalorder %s25, %s28
    %p34 = scmp.eq.s32.totalorder %s15, 0
    %p35 = por %p33, %p34
    %p36 = scmp.ne.s32.totalorder %s25, %s28
    %p37 = scmp.eq.s32.totalorder %s20, 1
    %p38 = por %p36, %p37
    %p39 = scmp.ne.s32.totalorder %s28, %s29
    %p40 = scmp.eq.s32.totalorder %s20, 0
    %p41 = por %p39, %p40
    %p42 = scmp.ne.s32.totalorder %s28, %s29
    %p43 = scmp.eq.s32.totalorder %s21, 1
    %p44 = por %p42, %p43
    %p46 = scmp.ne.s32.totalorder %s29, %s45
    %p47 = scmp.eq.s32.totalorder %s21, 0
    %p48 = por %p46, %p47
    %s50 = sadd.s32 %s49, 1
    %p53 = scmp.eq.s32.totalorder %s15, 1
    %p54 = scmp.ne.s32.totalorder %s49, %s51
    %p55 = scmp.eq.s32.totalorder %s15, 0
    %p56 = por %p54, %p55
    %p57 = scmp.ne.s32.totalorder %s49, %s51
    %p58 = scmp.eq.s32.totalorder %s20, 1
    %p59 = por %p57, %p58
    %p60 = scmp.ne.s32.totalorder %s51, %s52
    %p61 = scmp.eq.s32.totalorder %s20, 0
    %p62 = por %p60, %p61
    %p63 = scmp.ne.s32.totalorder %s51, %s52
    %p64 = scmp.eq.s32.totalorder %s21, 1
    %p65 = por %p63, %p64
    %p67 = scmp.ne.s32.totalorder %s52, %s66
    %p68 = scmp.eq.s32.totalorder %s21, 0
    %p69 = por %p67, %p68
    %s71 = sadd.s32 %s70, 1
    %p74 = scmp.eq.s32.totalorder %s15, 1
    %p75 = scmp.ne.s32.totalorder %s70, %s72
    %p76 = scmp.eq.s32.totalorder %s15, 0
    %p77 = por %p75, %p76
    %p78 = scmp.ne.s32.totalorder %s70, %s72
    %p79 = scmp.eq.s32.totalorder %s20, 1
    %p80 = por %p78, %p79
    %p81 = scmp.ne.s32.totalorder %s72, %s73
    %p82 = scmp.eq.s32.totalorder %s20, 0
    %p83 = por %p81, %p82
    %p84 = scmp.ne.s32.totalorder %s72, %s73
    %p85 = scmp.eq.s32.totalorder %s21, 1
    %p86 = por %p84, %p85
    %p88 = scmp.ne.s32.totalorder %s73, %s87
    %p89 = scmp.eq.s32.totalorder %s21, 0
    %p90 = por %p88, %p89
    %s92 = sadd.s32 %s91, 1
    %p95 = scmp.eq.s32.totalorder %s15, 1
    %p96 = scmp.ne.s32.totalorder %s91, %s93
    %p97 = scmp.eq.s32.totalorder %s15, 0
    %p98 = por %p96, %p97
    %p99 = scmp.ne.s32.totalorder %s91, %s93
    %p100 = scmp.eq.s32.totalorder %s20, 1
    %p101 = por %p99, %p100
    %p102 = scmp.ne.s32.totalorder %s93, %s94
    %p103 = scmp.eq.s32.totalorder %s20, 0
    %p104 = por %p102, %p103
    %p105 = scmp.ne.s32.totalorder %s93, %s94
    %p106 = scmp.eq.s32.totalorder %s21, 1
    %p107 = por %p105, %p106
    %p109 = scmp.ne.s32.totalorder %s94, %s108
    %p110 = scmp.eq.s32.totalorder %s21, 0
    %p111 = por %p109, %p110
    %s113 = sadd.s32 %s112, 1
    %p116 = scmp.eq.s32.totalorder %s15, 1
    %p117 = scmp.ne.s32.totalorder %s112, %s114
    %p118 = scmp.eq.s32.totalorder %s15, 0
    %p119 = por %p117, %p118
    %p120 = scmp.ne.s32.totalorder %s112, %s114
    %p121 = scmp.eq.s32.totalorder %s20, 1
    %p122 = por %p120, %p121
    %p123 = scmp.ne.s32.totalorder %s114, %s115
    %p124 = scmp.eq.s32.totalorder %s20, 0
    %p125 = por %p123, %p124
    %p126 = scmp.ne.s32.totalorder %s114, %s115
    %p127 = scmp.eq.s32.totalorder %s21, 1
    %p128 = por %p126, %p127
    %p130 = scmp.ne.s32.totalorder %s115, %s129
    %p131 = scmp.eq.s32.totalorder %s21, 0
    %p132 = por %p130, %p131
    %s134 = sadd.s32 %s133, 1
    %p137 = scmp.eq.s32.totalorder %s15, 1
    %p138 = scmp.ne.s32.totalorder %s133, %s135
    %p139 = scmp.eq.s32.totalorder %s15, 0
    %p140 = por %p138, %p139
    %p141 = scmp.ne.s32.totalorder %s133, %s135
    %p142 = scmp.eq.s32.totalorder %s20, 1
    %p143 = por %p141, %p142
    %p144 = scmp.ne.s32.totalorder %s135, %s136
    %p145 = scmp.eq.s32.totalorder %s20, 0
    %p146 = por %p144, %p145
    %p147 = scmp.ne.s32.totalorder %s135, %s136
    %p148 = scmp.eq.s32.totalorder %s21, 1
    %p149 = por %p147, %p148
    %p151 = scmp.ne.s32.totalorder %s136, %s150
    %p152 = scmp.eq.s32.totalorder %s21, 0
    %p153 = por %p151, %p152
    %s155 = sadd.s32 %s154, 1
    %p158 = scmp.eq.s32.totalorder %s15, 1
    %p159 = scmp.ne.s32.totalorder %s154, %s156
    %p160 = scmp.eq.s32.totalorder %s15, 0
    %p161 = por %p159, %p160
    %p162 = scmp.ne.s32.totalorder %s154, %s156
    %p163 = scmp.eq.s32.totalorder %s20, 1
    %p164 = por %p162, %p163
    %p165 = scmp.ne.s32.totalorder %s156, %s157
    %p166 = scmp.eq.s32.totalorder %s20, 0
    %p167 = por %p165, %p166
    %p168 = scmp.ne.s32.totalorder %s156, %s157
    %p169 = scmp.eq.s32.totalorder %s21, 1
    %p170 = por %p168, %p169
    %p172 = scmp.ne.s32.totalorder %s157, %s171
    %p173 = scmp.eq.s32.totalorder %s21, 0
    %p174 = por %p172, %p173
    %s176 = sadd.s32 %s175, 1
    %p179 = scmp.eq.s32.totalorder %s15, 1
    %p180 = scmp.ne.s32.totalorder %s175, %s177
    %p181 = scmp.eq.s32.totalorder %s15, 0
    %p182 = por %p180, %p181
    %p183 = scmp.ne.s32.totalorder %s175, %s177
    %p184 = scmp.eq.s32.totalorder %s20, 1
    %p185 = por %p183, %p184
    %p186 = scmp.ne.s32.totalorder %s177, %s178
    %p187 = scmp.eq.s32.totalorder %s20, 0
    %p188 = por %p186, %p187
    %p189 = scmp.ne.s32.totalorder %s177, %s178
    %p190 = scmp.eq.s32.totalorder %s21, 1
    %p191 = por %p189, %p190
    %p193 = scmp.ne.s32.totalorder %s178, %s192
    %p194 = scmp.eq.s32.totalorder %s21, 0
    %p195 = por %p193, %p194
    %s197 = sadd.s32 %s196, 1
    %p200 = scmp.eq.s32.totalorder %s15, 1
    %p201 = scmp.ne.s32.totalorder %s196, %s198
    %p202 = scmp.eq.s32.totalorder %s15, 0
    %p203 = por %p201, %p202
    %p204 = scmp.ne.s32.totalorder %s196, %s198
    %p205 = scmp.eq.s32.totalorder %s20, 1
    %p206 = por %p204, %p205
    %p207 = scmp.ne.s32.totalorder %s198, %s199
    %p208 = scmp.eq.s32.totalorder %s20, 0
    %p209 = por %p207, %p208
    %p210 = scmp.ne.s32.totalorder %s198, %s199
    %p211 = scmp.eq.s32.totalorder %s21, 1
    %p212 = por %p210, %p211
    %p214 = scmp.ne.s32.totalorder %s199, %s213
    %p215 = scmp.eq.s32.totalorder %s21, 0
    %p216 = por %p214, %p215
    %s217 = ssub.s32 %s15, %s22
    %p218 = scmp.eq.s32.totalorder %s217, 0
    %s220 = sadd.s32 %s219, 1
    %s221 = scalar_select %p218, %s219, %s220
    %p224 = pneg %p218
    %p225 = scmp.eq.s32.totalorder %s15, 1
    %p226 = por %p224, %p225
    %p227 = scmp.ne.s32.totalorder %s219, %s222
    %p228 = scmp.eq.s32.totalorder %s15, 0
    %p229 = por %p227, %p228
    %p230 = scmp.ne.s32.totalorder %s219, %s222
    %p231 = scmp.eq.s32.totalorder %s20, 1
    %p232 = por %p230, %p231
    %p233 = scmp.ne.s32.totalorder %s222, %s223
    %p234 = scmp.eq.s32.totalorder %s20, 0
    %p235 = por %p233, %p234
    %p236 = scmp.ne.s32.totalorder %s222, %s223
    %p237 = scmp.eq.s32.totalorder %s21, 1
    %p238 = por %p236, %p237
    %p240 = scmp.ne.s32.totalorder %s223, %s239
    %p241 = scmp.eq.s32.totalorder %s21, 0
    %p242 = por %p240, %p241
    %p243 = scmp.le.s32.totalorder 1, %s15
    %p244 = scmp.lt.s32.totalorder %s15, 3
    %p245 = pnand %p243, %p244
    %p246 = pneg %p245
    // Predicated region
    $region9: #{tpu_custom_call.1} parent=5 // pred_check
      _
    $region10: #{tpu_custom_call.1} parent=5 // pred_check_branch
      %248 = sbr.rel (%p245) target = $region12
    $region11: #{tpu_custom_call.1} parent=5 // pred_region
      %s249 = ssub.s32 %s15, 1
      // Predicated region
      $region13: #{tpu_custom_call.1} parent=11 // pred_check
        %p250 = pneg %p62
      $region14: #{tpu_custom_call.1} parent=11 // pred_check_branch
        %252 = sbr.rel (%p250) target = $region16
      $region15: #{tpu_custom_call.1} parent=11 // pred_region
        _
      $region16: #{tpu_custom_call.1} parent=11 // pred_fallthru
        _
      // Predicated region
      $region17: #{tpu_custom_call.1} parent=11 // pred_check
        %p253 = pneg %p83
      $region18: #{tpu_custom_call.1} parent=11 // pred_check_branch
        %255 = sbr.rel (%p253) target = $region20
      $region19: #{tpu_custom_call.1} parent=11 // pred_region
        _
      $region20: #{tpu_custom_call.1} parent=11 // pred_fallthru
        _
      // Predicated region
      $region21: #{tpu_custom_call.1} parent=11 // pred_check
        %p256 = pneg %p104
      $region22: #{tpu_custom_call.1} parent=11 // pred_check_branch
        %258 = sbr.rel (%p256) target = $region24
      $region23: #{tpu_custom_call.1} parent=11 // pred_region
        _
      $region24: #{tpu_custom_call.1} parent=11 // pred_fallthru
        _
      // Predicated region
      $region25: #{tpu_custom_call.1} parent=11 // pred_check
        %p259 = pneg %p125
      $region26: #{tpu_custom_call.1} parent=11 // pred_check_branch
        %261 = sbr.rel (%p259) target = $region28
      $region27: #{tpu_custom_call.1} parent=11 // pred_region
        _
      $region28: #{tpu_custom_call.1} parent=11 // pred_fallthru
        _
      // Predicated region
      $region29: #{tpu_custom_call.1} parent=11 // pred_check
        %p262 = pneg %p146
      $region30: #{tpu_custom_call.1} parent=11 // pred_check_branch
        %264 = sbr.rel (%p262) target = $region32
      $region31: #{tpu_custom_call.1} parent=11 // pred_region
        _
      $region32: #{tpu_custom_call.1} parent=11 // pred_fallthru
        _
      // Predicated region
      $region33: #{tpu_custom_call.1} parent=11 // pred_check
        %p265 = pneg %p167
      $region34: #{tpu_custom_call.1} parent=11 // pred_check_branch
        %267 = sbr.rel (%p265) target = $region36
      $region35: #{tpu_custom_call.1} parent=11 // pred_region
        _
      $region36: #{tpu_custom_call.1} parent=11 // pred_fallthru
        _
      // Predicated region
      $region37: #{tpu_custom_call.1} parent=11 // pred_check
        %p268 = pneg %p188
      $region38: #{tpu_custom_call.1} parent=11 // pred_check_branch
        %270 = sbr.rel (%p268) target = $region40
      $region39: #{tpu_custom_call.1} parent=11 // pred_region
        _
      $region40: #{tpu_custom_call.1} parent=11 // pred_fallthru
        _
      // Predicated region
      $region41: #{tpu_custom_call.1} parent=11 // pred_check
        %p271 = pneg %p209
      $region42: #{tpu_custom_call.1} parent=11 // pred_check_branch
        %273 = sbr.rel (%p271) target = $region44
      $region43: #{tpu_custom_call.1} parent=11 // pred_region
        _
      $region44: #{tpu_custom_call.1} parent=11 // pred_fallthru
        _
    $region12: #{tpu_custom_call.1} parent=5 // pred_fallthru
      _
    %p274 = scmp.lt.s32.totalorder %s15, 2
    // Predicated region
    $region45: #{tpu_custom_call.1} parent=5 // pred_check
      %p275 = pneg %p274
    $region46: #{tpu_custom_call.1} parent=5 // pred_check_branch
      %277 = sbr.rel (%p275) target = $region48
    $region47: #{tpu_custom_call.1} parent=5 // pred_region
      // Predicated region
      $region49: #{tpu_custom_call.1} parent=47 // pred_check
        %p278 = pneg %p35
      $region50: #{tpu_custom_call.1} parent=47 // pred_check_branch
        %280 = sbr.rel (%p278) target = $region52
      $region51: #{tpu_custom_call.1} parent=47 // pred_region
        %p281 = scmp.lt.s32.totalorder %s15, 1
        %s282 = scalar_select %p281, %s15, 1
        %s283 = smul.addr %s282, 8
        %s284 = smul.addr %s283, 4
        %s285 = scalar_lea.vmem %s0, %s284
      $region52: #{tpu_custom_call.1} parent=47 // pred_fallthru
        _
    $region48: #{tpu_custom_call.1} parent=5 // pred_fallthru
      _
    %p286 = scmp.le.s32.totalorder 1, %s15
    %p287 = scmp.lt.s32.totalorder %s15, 3
    %p288 = pnand %p286, %p287
    %p289 = pneg %p288
    // Predicated region
    $region53: #{tpu_custom_call.1} parent=5 // pred_check
      _
    $region54: #{tpu_custom_call.1} parent=5 // pred_check_branch
      %291 = sbr.rel (%p288) target = $region56
    $region55: #{tpu_custom_call.1} parent=5 // pred_region
      %s292 = ssub.s32 %s15, 1
      %p293 = scmp.lt.s32.totalorder %s20, 1
      %s294 = scalar_select %p293, %s20, 1
      %s295 = smul.addr %s294, 8
      %s296 = smul.addr %s295, 4
      %s297 = scalar_lea.vmem %s0, %s296
      %p298 = pneg %p41
      %p299 = pneg %p38
      %p300 = pneg %p62
      %p301 = pneg %p59
      %p302 = pneg %p83
      %p303 = pneg %p80
      %p304 = pneg %p104
      %p305 = pneg %p101
      %p306 = pneg %p125
      %p307 = pneg %p122
      %p308 = pneg %p146
      %p309 = pneg %p143
      %p310 = pneg %p167
      %p311 = pneg %p164
      %p312 = pneg %p188
      %p313 = pneg %p185
      %p314 = pneg %p209
      %p315 = pneg %p206
      %p316 = pneg %p235
      %p317 = pneg %p232
      %p318 = scmp.lt.s32.totalorder %s20, 1
      %s319 = scalar_select %p318, %s20, 1
      %s320 = smul.addr %s319, 8
      %s321 = smul.addr %s320, 8
      %s322 = scalar_lea.vmem %s9, %s321
      %p323 = scmp.lt.s32.totalorder %s20, 1
      %s324 = scalar_select %p323, %s20, 1
      %s325 = smul.addr %s324, 8
      %s326 = smul.addr %s325, 4
      %s327 = scalar_lea.vmem %s0, %s326
      %p328 = scmp.lt.s32.totalorder %s20, 1
      %s329 = scalar_select %p328, %s20, 1
      %s330 = smul.addr %s329, 8
      %s331 = smul.addr %s330, 8
      %s332 = scalar_lea.vmem %s9, %s331
      %v334 = vld [vmem:[%s327] sm:$0xf]
      %v335 = vld [vmem:[%s327 + $0x4] sm:$0xf]
      %v336 = vld [vmem:[%s327 + $0x8] sm:$0xf]
      %v337 = vld [vmem:[%s327 + $0xc] sm:$0xf]
      %v338 = vld [vmem:[%s327 + $0x10] sm:$0xf]
      %v339 = vld [vmem:[%s327 + $0x14] sm:$0xf]
      %v340 = vld [vmem:[%s327 + $0x18] sm:$0xf]
      %v341 = vld [vmem:[%s327 + $0x1c] sm:$0xf]
      %v342 = vld [vmem:[%s1] sm:$0xf]
      %v343 = vld [vmem:[%s1 + $0x4] sm:$0xf]
      %v344 = vld [vmem:[%s1 + $0x8] sm:$0xf]
      %v345 = vld [vmem:[%s1 + $0xc] sm:$0xf]
      %v346 = vld [vmem:[%s5] sm:$0x1]
      %v348 = vlaneseq
      %v349 = vshrl.u32 %v348, 7
      %v350 = vsub.s32 0, %v349
      %v351 = vrot.slane %v346, %v350
      %v361 = vunpack.c.l.b16 %v334
      %v362 = vunpack.c.l.b16 %v335
      %v363 = vunpack.c.l.b16 %v336
      %v364 = vunpack.c.l.b16 %v337
      %v365 = vunpack.c.l.b16 %v338
      %v366 = vunpack.c.l.b16 %v339
      %v367 = vunpack.c.l.b16 %v340
      %v368 = vunpack.c.l.b16 %v341
      %v369 = vpack.c.b16 %v362, %v361
      %v370 = vpack.c.b16 %v364, %v363
      %v371 = vpack.c.b16 %v366, %v365
      %v372 = vpack.c.b16 %v368, %v367
      %v377 = vunpack.c.l.b16 %v342
      %v378 = vunpack.c.l.b16 %v343
      %v379 = vunpack.c.l.b16 %v344
      %v380 = vunpack.c.l.b16 %v345
      %v381 = vpack.c.b16 %v378, %v377
      %v382 = vpack.c.b16 %v380, %v379
      %vm385 = vcmask 261120
      %v387 = vsel %vm385, %v369, 0
      %v390 = vsel %vm385, %v370, 0
      %v393 = vsel %vm385, %v371, 0
      %v396 = vsel %vm385, %v372, 0
      %398 = vmatprep.subr.bf16.mxu0 0
      %399 = vmatpush1.bf16.msra.mxu0 %v381
      %400 = vmatprep.subr.bf16.mxu0 0
      %401 = vmatpush1.bf16.msra.mxu0 %v382
      %402 = vmatprep.subr.bf16.mxu0 0
      %403 = vmatpush1.bf16.msra.mxu0 0
      %404 = vmatprep.subr.bf16.mxu0 0
      %405 = vmatpush1.bf16.msra.mxu0 0
      %406 = vmatprep.subr.bf16.mxu0 0
      %407 = vmatpush1.bf16.msra.mxu0 0
      %408 = vmatprep.subr.bf16.mxu0 0
      %409 = vmatpush1.bf16.msra.mxu0 0
      %410 = vmatprep.subr.bf16.mxu0 0
      %411 = vmatpush1.bf16.msra.mxu0 0
      %412 = vmatprep.subr.bf16.mxu0 0
      %413 = vmatpush1.bf16.msra.mxu0 0
      %414 = vmatprep.subr.bf16.mxu0 0
      %415 = vmatpush1.bf16.msra.mxu0 0
      %416 = vmatprep.subr.bf16.mxu0 0
      %417 = vmatpush1.bf16.msra.mxu0 0
      %418 = vmatprep.subr.bf16.mxu0 0
      %419 = vmatpush1.bf16.msra.mxu0 0
      %420 = vmatprep.subr.bf16.mxu0 0
      %421 = vmatpush1.bf16.msra.mxu0 0
      %422 = vmatprep.subr.bf16.mxu0 0
      %423 = vmatpush1.bf16.msra.mxu0 0
      %424 = vmatprep.subr.bf16.mxu0 0
      %425 = vmatpush1.bf16.msra.mxu0 0
      %426 = vmatprep.subr.bf16.mxu0 0
      %427 = vmatpush1.bf16.msra.mxu0 0
      %428 = vmatprep.subr.bf16.mxu0 0
      %429 = vmatpush1.bf16.msra.mxu0 0
      %430 = vmatprep.mubr.bf16.mxu0 0
      %431 = vmatmul.mubr.bf16.gmra.mrb[0].mxu0 %v387
      %v432 = vpop.f32.mrb[0].mxu0
      %v433 = vadd.f32 %v351, %v432
      %v434 = vpop.f32.mrb[0].mxu0
      %v435 = vpop.f32.mrb[0].mxu0
      %v436 = vadd.f32 %v351, %v435
      %v437 = vpop.f32.mrb[0].mxu0
      %438 = vmatprep.mubr.bf16.mxu0 0
      %439 = vmatmul.mubr.bf16.gmra.mrb[0].mxu0 %v390
      %v440 = vpop.f32.mrb[0].mxu0
      %v441 = vadd.f32 %v351, %v440
      %v442 = vpop.f32.mrb[0].mxu0
      %v443 = vpop.f32.mrb[0].mxu0
      %v444 = vadd.f32 %v351, %v443
      %v445 = vpop.f32.mrb[0].mxu0
      %446 = vmatprep.mubr.bf16.mxu0 0
      %447 = vmatmul.mubr.bf16.gmra.mrb[0].mxu0 %v393
      %v448 = vpop.f32.mrb[0].mxu0
      %v449 = vadd.f32 %v351, %v448
      %v450 = vpop.f32.mrb[0].mxu0
      %v451 = vpop.f32.mrb[0].mxu0
      %v452 = vadd.f32 %v351, %v451
      %v453 = vpop.f32.mrb[0].mxu0
      %454 = vmatprep.mubr.bf16.mxu0 0
      %455 = vmatmul.mubr.bf16.gmra.mrb[0].mxu0 %v396
      %v456 = vpop.f32.mrb[0].mxu0
      %v457 = vadd.f32 %v351, %v456
      %v458 = vpop.f32.mrb[0].mxu0
      %v459 = vpop.f32.mrb[0].mxu0
      %v460 = vadd.f32 %v351, %v459
      %v461 = vpop.f32.mrb[0].mxu0
      %462 = vdwg.mxu0
      %v463 = vmul.f32 %v433, 0.35355338
      %v464 = vmul.f32 %v436, 0.35355338
      %v465 = vmul.f32 %v441, 0.35355338
      %v466 = vmul.f32 %v444, 0.35355338
      %v467 = vmul.f32 %v449, 0.35355338
      %v468 = vmul.f32 %v452, 0.35355338
      %v469 = vmul.f32 %v457, 0.35355338
      %v470 = vmul.f32 %v460, 0.35355338
      %v471 = vld [vmem:[%s2] sm:$0xf]
      %v472 = vld [vmem:[%s2 + $0x4] sm:$0xf]
      %v473 = vld [vmem:[%s2 + $0x8] sm:$0xf]
      %v474 = vld [vmem:[%s2 + $0xc] sm:$0xf]
      %v475 = vld [vmem:[%s6] sm:$0x1]
      %v477 = vlaneseq
      %v478 = vshrl.u32 %v477, 7
      %v479 = vsub.s32 0, %v478
      %v480 = vrot.slane %v475, %v479
      %v486 = vunpack.c.l.b16 %v471
      %v487 = vunpack.c.l.b16 %v472
      %v488 = vunpack.c.l.b16 %v473
      %v489 = vunpack.c.l.b16 %v474
      %v490 = vpack.c.b16 %v487, %v486
      %v491 = vpack.c.b16 %v489, %v488
      %494 = vmatprep.subr.bf16.mxu0 0
      %495 = vmatpush1.bf16.msra.mxu0 %v490
      %496 = vmatprep.subr.bf16.mxu0 0
      %497 = vmatpush1.bf16.msra.mxu0 %v491
      %498 = vmatprep.subr.bf16.mxu0 0
      %499 = vmatpush1.bf16.msra.mxu0 0
      %500 = vmatprep.subr.bf16.mxu0 0
      %501 = vmatpush1.bf16.msra.mxu0 0
      %502 = vmatprep.subr.bf16.mxu0 0
      %503 = vmatpush1.bf16.msra.mxu0 0
      %504 = vmatprep.subr.bf16.mxu0 0
      %505 = vmatpush1.bf16.msra.mxu0 0
      %506 = vmatprep.subr.bf16.mxu0 0
      %507 = vmatpush1.bf16.msra.mxu0 0
      %508 = vmatprep.subr.bf16.mxu0 0
      %509 = vmatpush1.bf16.msra.mxu0 0
      %510 = vmatprep.subr.bf16.mxu0 0
      %511 = vmatpush1.bf16.msra.mxu0 0
      %512 = vmatprep.subr.bf16.mxu0 0
      %513 = vmatpush1.bf16.msra.mxu0 0
      %514 = vmatprep.subr.bf16.mxu0 0
      %515 = vmatpush1.bf16.msra.mxu0 0
      %516 = vmatprep.subr.bf16.mxu0 0
      %517 = vmatpush1.bf16.msra.mxu0 0
      %518 = vmatprep.subr.bf16.mxu0 0
      %519 = vmatpush1.bf16.msra.mxu0 0
      %520 = vmatprep.subr.bf16.mxu0 0
      %521 = vmatpush1.bf16.msra.mxu0 0
      %522 = vmatprep.subr.bf16.mxu0 0
      %523 = vmatpush1.bf16.msra.mxu0 0
      %524 = vmatprep.subr.bf16.mxu0 0
      %525 = vmatpush1.bf16.msra.mxu0 0
      %526 = vmatprep.mubr.bf16.mxu0 0
      %527 = vmatmul.mubr.bf16.gmra.mrb[0].mxu0 %v387
      %v528 = vpop.f32.mrb[0].mxu0
      %v529 = vadd.f32 %v480, %v528
      %v530 = vpop.f32.mrb[0].mxu0
      %v531 = vpop.f32.mrb[0].mxu0
      %v532 = vadd.f32 %v480, %v531
      %v533 = vpop.f32.mrb[0].mxu0
      %534 = vmatprep.mubr.bf16.mxu0 0
      %535 = vmatmul.mubr.bf16.gmra.mrb[0].mxu0 %v390
      %v536 = vpop.f32.mrb[0].mxu0
      %v537 = vadd.f32 %v480, %v536
      %v538 = vpop.f32.mrb[0].mxu0
      %v539 = vpop.f32.mrb[0].mxu0
      %v540 = vadd.f32 %v480, %v539
      %v541 = vpop.f32.mrb[0].mxu0
      %542 = vmatprep.mubr.bf16.mxu0 0
      %543 = vmatmul.mubr.bf16.gmra.mrb[0].mxu0 %v393
      %v544 = vpop.f32.mrb[0].mxu0
      %v545 = vadd.f32 %v480, %v544
      %v546 = vpop.f32.mrb[0].mxu0
      %v547 = vpop.f32.mrb[0].mxu0
      %v548 = vadd.f32 %v480, %v547
      %v549 = vpop.f32.mrb[0].mxu0
      %550 = vmatprep.mubr.bf16.mxu0 0
      %551 = vmatmul.mubr.bf16.gmra.mrb[0].mxu0 %v396
      %v552 = vpop.f32.mrb[0].mxu0
      %v553 = vadd.f32 %v480, %v552
      %v554 = vpop.f32.mrb[0].mxu0
      %v555 = vpop.f32.mrb[0].mxu0
      %v556 = vadd.f32 %v480, %v555
      %v557 = vpop.f32.mrb[0].mxu0
      %558 = vdwg.mxu0
      %v559 = vld [vmem:[%s3] sm:$0xf]
      %v560 = vld [vmem:[%s3 + $0x4] sm:$0xf]
      %v561 = vld [vmem:[%s3 + $0x8] sm:$0xf]
      %v562 = vld [vmem:[%s3 + $0xc] sm:$0xf]
      %v563 = vld [vmem:[%s7] sm:$0x1]
      %v565 = vlaneseq
      %v566 = vshrl.u32 %v565, 7
      %v567 = vsub.s32 0, %v566
      %v568 = vrot.slane %v563, %v567
      %v574 = vunpack.c.l.b16 %v559
      %v575 = vunpack.c.l.b16 %v560
      %v576 = vunpack.c.l.b16 %v561
      %v577 = vunpack.c.l.b16 %v562
      %v578 = vpack.c.b16 %v575, %v574
      %v579 = vpack.c.b16 %v577, %v576
      %582 = vmatprep.subr.bf16.mxu0 0
      %583 = vmatpush1.bf16.msra.mxu0 %v578
      %584 = vmatprep.subr.bf16.mxu0 0
      %585 = vmatpush1.bf16.msra.mxu0 %v579
      %586 = vmatprep.subr.bf16.mxu0 0
      %587 = vmatpush1.bf16.msra.mxu0 0
      %588 = vmatprep.subr.bf16.mxu0 0
      %589 = vmatpush1.bf16.msra.mxu0 0
      %590 = vmatprep.subr.bf16.mxu0 0
      %591 = vmatpush1.bf16.msra.mxu0 0
      %592 = vmatprep.subr.bf16.mxu0 0
      %593 = vmatpush1.bf16.msra.mxu0 0
      %594 = vmatprep.subr.bf16.mxu0 0
      %595 = vmatpush1.bf16.msra.mxu0 0
      %596 = vmatprep.subr.bf16.mxu0 0
      %597 = vmatpush1.bf16.msra.mxu0 0
      %598 = vmatprep.subr.bf16.mxu0 0
      %599 = vmatpush1.bf16.msra.mxu0 0
      %600 = vmatprep.subr.bf16.mxu0 0
      %601 = vmatpush1.bf16.msra.mxu0 0
      %602 = vmatprep.subr.bf16.mxu0 0
      %603 = vmatpush1.bf16.msra.mxu0 0
      %604 = vmatprep.subr.bf16.mxu0 0
      %605 = vmatpush1.bf16.msra.mxu0 0
      %606 = vmatprep.subr.bf16.mxu0 0
      %607 = vmatpush1.bf16.msra.mxu0 0
      %608 = vmatprep.subr.bf16.mxu0 0
      %609 = vmatpush1.bf16.msra.mxu0 0
      %610 = vmatprep.subr.bf16.mxu0 0
      %611 = vmatpush1.bf16.msra.mxu0 0
      %612 = vmatprep.subr.bf16.mxu0 0
      %613 = vmatpush1.bf16.msra.mxu0 0
      %614 = vmatprep.mubr.bf16.mxu0 0
      %615 = vmatmul.mubr.bf16.gmra.mrb[0].mxu0 %v387
      %v616 = vpop.f32.mrb[0].mxu0
      %v617 = vadd.f32 %v568, %v616
      %v618 = vpop.f32.mrb[0].mxu0
      %v619 = vpop.f32.mrb[0].mxu0
      %v620 = vadd.f32 %v568, %v619
      %v621 = vpop.f32.mrb[0].mxu0
      %622 = vmatprep.mubr.bf16.mxu0 0
      %623 = vmatmul.mubr.bf16.gmra.mrb[0].mxu0 %v390
      %v624 = vpop.f32.mrb[0].mxu0
      %v625 = vadd.f32 %v568, %v624
      %v626 = vpop.f32.mrb[0].mxu0
      %v627 = vpop.f32.mrb[0].mxu0
      %v628 = vadd.f32 %v568, %v627
      %v629 = vpop.f32.mrb[0].mxu0
      %630 = vmatprep.mubr.bf16.mxu0 0
      %631 = vmatmul.mubr.bf16.gmra.mrb[0].mxu0 %v393
      %v632 = vpop.f32.mrb[0].mxu0
      %v633 = vadd.f32 %v568, %v632
      %v634 = vpop.f32.mrb[0].mxu0
      %v635 = vpop.f32.mrb[0].mxu0
      %v636 = vadd.f32 %v568, %v635
      %v637 = vpop.f32.mrb[0].mxu0
      %638 = vmatprep.mubr.bf16.mxu0 0
      %639 = vmatmul.mubr.bf16.gmra.mrb[0].mxu0 %v396
      %v640 = vpop.f32.mrb[0].mxu0
      %v641 = vadd.f32 %v568, %v640
      %v642 = vpop.f32.mrb[0].mxu0
      %v643 = vpop.f32.mrb[0].mxu0
      %v644 = vadd.f32 %v568, %v643
      %v645 = vpop.f32.mrb[0].mxu0
      %646 = vdwg.mxu0
      %v647 = vpack.c.bf16 %v620, %v617
      %v648 = vpack.c.bf16 %v628, %v625
      %v649 = vpack.c.bf16 %v636, %v633
      %v650 = vpack.c.bf16 %v644, %v641
      %vm651 = vcmask 64512
      %v653 = vsel %vm651, %v463, 0
      %v656 = vsel %vm651, %v464, 0
      %v659 = vsel %vm651, %v465, 0
      %v662 = vsel %vm651, %v466, 0
      %v665 = vsel %vm651, %v467, 0
      %v668 = vsel %vm651, %v468, 0
      %v671 = vsel %vm651, %v469, 0
      %v674 = vsel %vm651, %v470, 0
      %v677 = vsel %vm651, %v529, 0
      %v680 = vsel %vm651, %v532, 0
      %v683 = vsel %vm651, %v537, 0
      %v686 = vsel %vm651, %v540, 0
      %v689 = vsel %vm651, %v545, 0
      %v692 = vsel %vm651, %v548, 0
      %v695 = vsel %vm651, %v553, 0
      %v698 = vsel %vm651, %v556, 0
      %700 = vmatprep.subr.mxu0 0.0
      %701 = vmatpush1.xpose.msra.mxu0 %v677
      %702 = vmatprep.subr.mxu0 0.0
      %703 = vmatpush1.xpose.msra.mxu0 %v680
      %704 = vmatprep.subr.mxu0 0.0
      %705 = vmatpush1.xpose.msra.mxu0 %v683
      %706 = vmatprep.subr.mxu0 0.0
      %707 = vmatpush1.xpose.msra.mxu0 %v686
      %708 = vmatprep.subr.mxu0 0.0
      %709 = vmatpush1.xpose.msra.mxu0 %v689
      %710 = vmatprep.subr.mxu0 0.0
      %711 = vmatpush1.xpose.msra.mxu0 %v692
      %712 = vmatprep.subr.mxu0 0.0
      %713 = vmatpush1.xpose.msra.mxu0 %v695
      %714 = vmatprep.subr.mxu0 0.0
      %715 = vmatpush1.xpose.msra.mxu0 %v698
      %716 = vmatprep.subr.mxu0 0.0
      %717 = vmatpush1.xpose.msra.mxu0 0.0
      %718 = vmatprep.subr.mxu0 0.0
      %719 = vmatpush1.xpose.msra.mxu0 0.0
      %720 = vmatprep.subr.mxu0 0.0
      %721 = vmatpush1.xpose.msra.mxu0 0.0
      %722 = vmatprep.subr.mxu0 0.0
      %723 = vmatpush1.xpose.msra.mxu0 0.0
      %724 = vmatprep.subr.mxu0 0.0
      %725 = vmatpush1.xpose.msra.mxu0 0.0
      %726 = vmatprep.subr.mxu0 0.0
      %727 = vmatpush1.xpose.msra.mxu0 0.0
      %728 = vmatprep.subr.mxu0 0.0
      %729 = vmatpush1.xpose.msra.mxu0 0.0
      %730 = vmatprep.subr.mxu0 0.0
      %731 = vmatpush1.xpose.msra.mxu0 0.0
      %732 = vmatprep.subr.mxu0 0.0
      %733 = vmatpush1.xpose.msra.mxu0 0.0
      %734 = vmatprep.subr.mxu0 0.0
      %735 = vmatpush1.xpose.msra.mxu0 0.0
      %736 = vmatprep.subr.mxu0 0.0
      %737 = vmatpush1.xpose.msra.mxu0 0.0
      %738 = vmatprep.subr.mxu0 0.0
      %739 = vmatpush1.xpose.msra.mxu0 0.0
      %740 = vmatprep.subr.mxu0 0.0
      %741 = vmatpush1.xpose.msra.mxu0 0.0
      %742 = vmatprep.subr.mxu0 0.0
      %743 = vmatpush1.xpose.msra.mxu0 0.0
      %744 = vmatprep.subr.mxu0 0.0
      %745 = vmatpush1.xpose.msra.mxu0 0.0
      %746 = vmatprep.subr.mxu0 0.0
      %747 = vmatpush1.xpose.msra.mxu0 0.0
      %748 = vmatprep.subr.mxu0 0.0
      %749 = vmatpush1.xpose.msra.mxu0 0.0
      %750 = vmatprep.subr.mxu0 0.0
      %751 = vmatpush1.xpose.msra.mxu0 0.0
      %752 = vmatprep.subr.mxu0 0.0
      %753 = vmatpush1.xpose.msra.mxu0 0.0
      %754 = vmatprep.subr.mxu0 0.0
      %755 = vmatpush1.xpose.msra.mxu0 0.0
      %756 = vmatprep.subr.mxu0 0.0
      %757 = vmatpush1.xpose.msra.mxu0 0.0
      %758 = vmatprep.subr.mxu0 0.0
      %759 = vmatpush1.xpose.msra.mxu0 0.0
      %760 = vmatprep.subr.mxu0 0.0
      %761 = vmatpush1.xpose.msra.mxu0 0.0
      %762 = vmatprep.subr.mxu0 0.0
      %763 = vmatpush1.xpose.msra.mxu0 0.0
      %764 = vmatprep.mubr.f32.mxu0 0.0
      %765 = vmatmul.mubr.f32.gmra.mrb[0].mxu0 %v653
      %v766 = vpop.f32.mrb[0].mxu0
      %v767 = vadd.f32 0.0, %v766
      %v768 = vpop.f32.mrb[0].mxu0
      %769 = vmatprep.mubr.f32.mxu0 0.0
      %770 = vmatmul.mubr.f32.gmra.mrb[0].mxu0 %v656
      %v771 = vpop.f32.mrb[0].mxu0
      %v772 = vadd.f32 0.0, %v771
      %v773 = vpop.f32.mrb[0].mxu0
      %774 = vmatprep.mubr.f32.mxu0 0.0
      %775 = vmatmul.mubr.f32.gmra.mrb[0].mxu0 %v659
      %v776 = vpop.f32.mrb[0].mxu0
      %v777 = vadd.f32 0.0, %v776
      %v778 = vpop.f32.mrb[0].mxu0
      %779 = vmatprep.mubr.f32.mxu0 0.0
      %780 = vmatmul.mubr.f32.gmra.mrb[0].mxu0 %v662
      %v781 = vpop.f32.mrb[0].mxu0
      %v782 = vadd.f32 0.0, %v781
      %v783 = vpop.f32.mrb[0].mxu0
      %784 = vmatprep.mubr.f32.mxu0 0.0
      %785 = vmatmul.mubr.f32.gmra.mrb[0].mxu0 %v665
      %v786 = vpop.f32.mrb[0].mxu0
      %v787 = vadd.f32 0.0, %v786
      %v788 = vpop.f32.mrb[0].mxu0
      %789 = vmatprep.mubr.f32.mxu0 0.0
      %790 = vmatmul.mubr.f32.gmra.mrb[0].mxu0 %v668
      %v791 = vpop.f32.mrb[0].mxu0
      %v792 = vadd.f32 0.0, %v791
      %v793 = vpop.f32.mrb[0].mxu0
      %794 = vmatprep.mubr.f32.mxu0 0.0
      %795 = vmatmul.mubr.f32.gmra.mrb[0].mxu0 %v671
      %v796 = vpop.f32.mrb[0].mxu0
      %v797 = vadd.f32 0.0, %v796
      %v798 = vpop.f32.mrb[0].mxu0
      %799 = vmatprep.mubr.f32.mxu0 0.0
      %800 = vmatmul.mubr.f32.gmra.mrb[0].mxu0 %v674
      %v801 = vpop.f32.mrb[0].mxu0
      %v802 = vadd.f32 0.0, %v801
      %v803 = vpop.f32.mrb[0].mxu0
      %804 = vdwg.mxu0
      %vm805 = vcmask 523264
      %v806 = vsel %vm805, %v767, -inf
      %807 = vmax.xlane.f32.xlu0 %v806
      %v808 = vpop.xlane.xlu0 %807
      %v809 = vsel %vm805, %v772, -inf
      %810 = vmax.xlane.f32.xlu0 %v809
      %v811 = vpop.xlane.xlu0 %810
      %v812 = vsel %vm805, %v777, -inf
      %813 = vmax.xlane.f32.xlu0 %v812
      %v814 = vpop.xlane.xlu0 %813
      %v815 = vsel %vm805, %v782, -inf
      %816 = vmax.xlane.f32.xlu0 %v815
      %v817 = vpop.xlane.xlu0 %816
      %v818 = vsel %vm805, %v787, -inf
      %819 = vmax.xlane.f32.xlu0 %v818
      %v820 = vpop.xlane.xlu0 %819
      %v821 = vsel %vm805, %v792, -inf
      %822 = vmax.xlane.f32.xlu0 %v821
      %v823 = vpop.xlane.xlu0 %822
      %v824 = vsel %vm805, %v797, -inf
      %825 = vmax.xlane.f32.xlu0 %v824
      %v826 = vpop.xlane.xlu0 %825
      %v827 = vsel %vm805, %v802, -inf
      %828 = vmax.xlane.f32.xlu0 %v827
      %v829 = vpop.xlane.xlu0 %828
      %v830 = vsub.f32 %v767, %v808
      %v831 = vsub.f32 %v772, %v811
      %v832 = vsub.f32 %v777, %v814
      %v833 = vsub.f32 %v782, %v817
      %v834 = vsub.f32 %v787, %v820
      %v835 = vsub.f32 %v792, %v823
      %v836 = vsub.f32 %v797, %v826
      %v837 = vsub.f32 %v802, %v829
      %v838 = vmul.f32 %v830, 1.442695
      %v839 = vpow.pop %v838
      %v840 = vmul.f32 %v831, 1.442695
      %v841 = vpow.pop %v840
      %v842 = vmul.f32 %v832, 1.442695
      %v843 = vpow.pop %v842
      %v844 = vmul.f32 %v833, 1.442695
      %v845 = vpow.pop %v844
      %v846 = vmul.f32 %v834, 1.442695
      %v847 = vpow.pop %v846
      %v848 = vmul.f32 %v835, 1.442695
      %v849 = vpow.pop %v848
      %v850 = vmul.f32 %v836, 1.442695
      %v851 = vpow.pop %v850
      %v852 = vmul.f32 %v837, 1.442695
      %v853 = vpow.pop %v852
      %v854 = vsel %vm805, %v839, 0.0
      %855 = vadd.xlane.f32.xlu0 %v854
      %v856 = vpop.xlane.xlu0 %855
      %v857 = vsel %vm805, %v841, 0.0
      %858 = vadd.xlane.f32.xlu0 %v857
      %v859 = vpop.xlane.xlu0 %858
      %v860 = vsel %vm805, %v843, 0.0
      %861 = vadd.xlane.f32.xlu0 %v860
      %v862 = vpop.xlane.xlu0 %861
      %v863 = vsel %vm805, %v845, 0.0
      %864 = vadd.xlane.f32.xlu0 %v863
      %v865 = vpop.xlane.xlu0 %864
      %v866 = vsel %vm805, %v847, 0.0
      %867 = vadd.xlane.f32.xlu0 %v866
      %v868 = vpop.xlane.xlu0 %867
      %v869 = vsel %vm805, %v849, 0.0
      %870 = vadd.xlane.f32.xlu0 %v869
      %v871 = vpop.xlane.xlu0 %870
      %v872 = vsel %vm805, %v851, 0.0
      %873 = vadd.xlane.f32.xlu0 %v872
      %v874 = vpop.xlane.xlu0 %873
      %v875 = vsel %vm805, %v853, 0.0
      %876 = vadd.xlane.f32.xlu0 %v875
      %v877 = vpop.xlane.xlu0 %876
      %v878 = vpack.c.bf16 %v841, %v839
      %v879 = vpack.c.bf16 %v845, %v843
      %v880 = vpack.c.bf16 %v849, %v847
      %v881 = vpack.c.bf16 %v853, %v851
      %v883 = vsel %vm805, %v878, 0
      %v886 = vsel %vm805, %v879, 0
      %v889 = vsel %vm805, %v880, 0
      %v892 = vsel %vm805, %v881, 0
      %894 = vmatprep.subr.bf16.mxu0 0
      %895 = vmatpush1.bf16.msra.mxu0 %v647
      %896 = vmatprep.subr.bf16.mxu0 0
      %897 = vmatpush1.bf16.msra.mxu0 %v648
      %898 = vmatprep.subr.bf16.mxu0 0
      %899 = vmatpush1.bf16.msra.mxu0 %v649
      %900 = vmatprep.subr.bf16.mxu0 0
      %901 = vmatpush1.bf16.msra.mxu0 %v650
      %902 = vmatprep.subr.bf16.mxu0 0
      %903 = vmatpush1.bf16.msra.mxu0 0
      %904 = vmatprep.subr.bf16.mxu0 0
      %905 = vmatpush1.bf16.msra.mxu0 0
      %906 = vmatprep.subr.bf16.mxu0 0
      %907 = vmatpush1.bf16.msra.mxu0 0
      %908 = vmatprep.subr.bf16.mxu0 0
      %909 = vmatpush1.bf16.msra.mxu0 0
      %910 = vmatprep.subr.bf16.mxu0 0
      %911 = vmatpush1.bf16.msra.mxu0 0
      %912 = vmatprep.subr.bf16.mxu0 0
      %913 = vmatpush1.bf16.msra.mxu0 0
      %914 = vmatprep.subr.bf16.mxu0 0
      %915 = vmatpush1.bf16.msra.mxu0 0
      %916 = vmatprep.subr.bf16.mxu0 0
      %917 = vmatpush1.bf16.msra.mxu0 0
      %918 = vmatprep.subr.bf16.mxu0 0
      %919 = vmatpush1.bf16.msra.mxu0 0
      %920 = vmatprep.subr.bf16.mxu0 0
      %921 = vmatpush1.bf16.msra.mxu0 0
      %922 = vmatprep.subr.bf16.mxu0 0
      %923 = vmatpush1.bf16.msra.mxu0 0
      %924 = vmatprep.subr.bf16.mxu0 0
      %925 = vmatpush1.bf16.msra.mxu0 0
      %926 = vmatprep.mubr.bf16.mxu0 0
      %927 = vmatmul.mubr.bf16.gmra.mrb[0].mxu0 %v883
      %v928 = vpop.f32.mrb[0].mxu0
      %v929 = vadd.f32 0.0, %v928
      %v930 = vpop.f32.mrb[0].mxu0
      %v931 = vpop.f32.mrb[0].mxu0
      %v932 = vadd.f32 0.0, %v931
      %v933 = vpop.f32.mrb[0].mxu0
      %934 = vmatprep.mubr.bf16.mxu0 0
      %935 = vmatmul.mubr.bf16.gmra.mrb[0].mxu0 %v886
      %v936 = vpop.f32.mrb[0].mxu0
      %v937 = vadd.f32 0.0, %v936
      %v938 = vpop.f32.mrb[0].mxu0
      %v939 = vpop.f32.mrb[0].mxu0
      %v940 = vadd.f32 0.0, %v939
      %v941 = vpop.f32.mrb[0].mxu0
      %942 = vmatprep.mubr.bf16.mxu0 0
      %943 = vmatmul.mubr.bf16.gmra.mrb[0].mxu0 %v889
      %v944 = vpop.f32.mrb[0].mxu0
      %v945 = vadd.f32 0.0, %v944
      %v946 = vpop.f32.mrb[0].mxu0
      %v947 = vpop.f32.mrb[0].mxu0
      %v948 = vadd.f32 0.0, %v947
      %v949 = vpop.f32.mrb[0].mxu0
      %950 = vmatprep.mubr.bf16.mxu0 0
      %951 = vmatmul.mubr.bf16.gmra.mrb[0].mxu0 %v892
      %v952 = vpop.f32.mrb[0].mxu0
      %v953 = vadd.f32 0.0, %v952
      %v954 = vpop.f32.mrb[0].mxu0
      %v955 = vpop.f32.mrb[0].mxu0
      %v956 = vadd.f32 0.0, %v955
      %v957 = vpop.f32.mrb[0].mxu0
      %958 = vdwg.mxu0
      %v959 = vrcp.pop %v856
      %v960 = vrcp.pop %v859
      %v961 = vrcp.pop %v862
      %v962 = vrcp.pop %v865
      %v963 = vrcp.pop %v868
      %v964 = vrcp.pop %v871
      %v965 = vrcp.pop %v874
      %v966 = vrcp.pop %v877
      %v967 = vmul.f32 %v929, %v959
      %v968 = vmul.f32 %v932, %v960
      %v969 = vmul.f32 %v937, %v961
      %v970 = vmul.f32 %v940, %v962
      %v971 = vmul.f32 %v945, %v963
      %v972 = vmul.f32 %v948, %v964
      %v973 = vmul.f32 %v953, %v965
      %v974 = vmul.f32 %v956, %v966
      %975 = vst.msk [vmem:[#allocation2] sm:$0xff] %vm651, %v967
      %976 = vst.msk [vmem:[#allocation2 + $0x8] sm:$0xff] %vm651, %v968
      %977 = vst.msk [vmem:[#allocation2 + $0x10] sm:$0xff] %vm651, %v969
      %978 = vst.msk [vmem:[#allocation2 + $0x18] sm:$0xff] %vm651, %v970
      %979 = vst.msk [vmem:[#allocation2 + $0x20] sm:$0xff] %vm651, %v971
      %980 = vst.msk [vmem:[#allocation2 + $0x28] sm:$0xff] %vm651, %v972
      %981 = vst.msk [vmem:[#allocation2 + $0x30] sm:$0xff] %vm651, %v973
      %982 = vst.msk [vmem:[#allocation2 + $0x38] sm:$0xff] %vm651, %v974
      %983 = vrot.lane.b32.xlu0 %v463, 120
      %v984 = vpop.permute.xlu0 %983
      %985 = vrot.lane.b32.xlu0 %v464, 120
      %v986 = vpop.permute.xlu0 %985
      %987 = vrot.lane.b32.xlu0 %v465, 120
      %v988 = vpop.permute.xlu0 %987
      %989 = vrot.lane.b32.xlu0 %v466, 120
      %v990 = vpop.permute.xlu0 %989
      %991 = vrot.lane.b32.xlu0 %v467, 120
      %v992 = vpop.permute.xlu0 %991
      %993 = vrot.lane.b32.xlu0 %v468, 120
      %v994 = vpop.permute.xlu0 %993
      %995 = vrot.lane.b32.xlu0 %v469, 120
      %v996 = vpop.permute.xlu0 %995
      %997 = vrot.lane.b32.xlu0 %v470, 120
      %v998 = vpop.permute.xlu0 %997
      %999 = vrot.lane.b32.xlu0 %v529, 120
      %v1000 = vpop.permute.xlu0 %999
      %1001 = vrot.lane.b32.xlu0 %v532, 120
      %v1002 = vpop.permute.xlu0 %1001
      %1003 = vrot.lane.b32.xlu0 %v537, 120
      %v1004 = vpop.permute.xlu0 %1003
      %1005 = vrot.lane.b32.xlu0 %v540, 120
      %v1006 = vpop.permute.xlu0 %1005
      %1007 = vrot.lane.b32.xlu0 %v545, 120
      %v1008 = vpop.permute.xlu0 %1007
      %1009 = vrot.lane.b32.xlu0 %v548, 120
      %v1010 = vpop.permute.xlu0 %1009
      %1011 = vrot.lane.b32.xlu0 %v553, 120
      %v1012 = vpop.permute.xlu0 %1011
      %1013 = vrot.lane.b32.xlu0 %v556, 120
      %v1014 = vpop.permute.xlu0 %1013
      %v1015 = vsel %vm651, %v984, 0
      %v1017 = vsel %vm651, %v986, 0
      %v1019 = vsel %vm651, %v988, 0
      %v1021 = vsel %vm651, %v990, 0
      %v1023 = vsel %vm651, %v992, 0
      %v1025 = vsel %vm651, %v994, 0
      %v1027 = vsel %vm651, %v996, 0
      %v1029 = vsel %vm651, %v998, 0
      %v1031 = vsel %vm651, %v1000, 0
      %v1033 = vsel %vm651, %v1002, 0
      %v1035 = vsel %vm651, %v1004, 0
      %v1037 = vsel %vm651, %v1006, 0
      %v1039 = vsel %vm651, %v1008, 0
      %v1041 = vsel %vm651, %v1010, 0
      %v1043 = vsel %vm651, %v1012, 0
      %v1045 = vsel %vm651, %v1014, 0
      %1047 = vmatprep.subr.mxu0 0.0
      %1048 = vmatpush1.xpose.msra.mxu0 %v1031
      %1049 = vmatprep.subr.mxu0 0.0
      %1050 = vmatpush1.xpose.msra.mxu0 %v1033
      %1051 = vmatprep.subr.mxu0 0.0
      %1052 = vmatpush1.xpose.msra.mxu0 %v1035
      %1053 = vmatprep.subr.mxu0 0.0
      %1054 = vmatpush1.xpose.msra.mxu0 %v1037
      %1055 = vmatprep.subr.mxu0 0.0
      %1056 = vmatpush1.xpose.msra.mxu0 %v1039
      %1057 = vmatprep.subr.mxu0 0.0
      %1058 = vmatpush1.xpose.msra.mxu0 %v1041
      %1059 = vmatprep.subr.mxu0 0.0
      %1060 = vmatpush1.xpose.msra.mxu0 %v1043
      %1061 = vmatprep.subr.mxu0 0.0
      %1062 = vmatpush1.xpose.msra.mxu0 %v1045
      %1063 = vmatprep.subr.mxu0 0.0
      %1064 = vmatpush1.xpose.msra.mxu0 0.0
      %1065 = vmatprep.subr.mxu0 0.0
      %1066 = vmatpush1.xpose.msra.mxu0 0.0
      %1067 = vmatprep.subr.mxu0 0.0
      %1068 = vmatpush1.xpose.msra.mxu0 0.0
      %1069 = vmatprep.subr.mxu0 0.0
      %1070 = vmatpush1.xpose.msra.mxu0 0.0
      %1071 = vmatprep.subr.mxu0 0.0
      %1072 = vmatpush1.xpose.msra.mxu0 0.0
      %1073 = vmatprep.subr.mxu0 0.0
      %1074 = vmatpush1.xpose.msra.mxu0 0.0
      %1075 = vmatprep.subr.mxu0 0.0
      %1076 = vmatpush1.xpose.msra.mxu0 0.0
      %1077 = vmatprep.subr.mxu0 0.0
      %1078 = vmatpush1.xpose.msra.mxu0 0.0
      %1079 = vmatprep.subr.mxu0 0.0
      %1080 = vmatpush1.xpose.msra.mxu0 0.0
      %1081 = vmatprep.subr.mxu0 0.0
      %1082 = vmatpush1.xpose.msra.mxu0 0.0
      %1083 = vmatprep.subr.mxu0 0.0
      %1084 = vmatpush1.xpose.msra.mxu0 0.0
      %1085 = vmatprep.subr.mxu0 0.0
      %1086 = vmatpush1.xpose.msra.mxu0 0.0
      %1087 = vmatprep.subr.mxu0 0.0
      %1088 = vmatpush1.xpose.msra.mxu0 0.0
      %1089 = vmatprep.subr.mxu0 0.0
      %1090 = vmatpush1.xpose.msra.mxu0 0.0
      %1091 = vmatprep.subr.mxu0 0.0
      %1092 = vmatpush1.xpose.msra.mxu0 0.0
      %1093 = vmatprep.subr.mxu0 0.0
      %1094 = vmatpush1.xpose.msra.mxu0 0.0
      %1095 = vmatprep.subr.mxu0 0.0
      %1096 = vmatpush1.xpose.msra.mxu0 0.0
      %1097 = vmatprep.subr.mxu0 0.0
      %1098 = vmatpush1.xpose.msra.mxu0 0.0
      %1099 = vmatprep.subr.mxu0 0.0
      %1100 = vmatpush1.xpose.msra.mxu0 0.0
      %1101 = vmatprep.subr.mxu0 0.0
      %1102 = vmatpush1.xpose.msra.mxu0 0.0
      %1103 = vmatprep.subr.mxu0 0.0
      %1104 = vmatpush1.xpose.msra.mxu0 0.0
      %1105 = vmatprep.subr.mxu0 0.0
      %1106 = vmatpush1.xpose.msra.mxu0 0.0
      %1107 = vmatprep.subr.mxu0 0.0
      %1108 = vmatpush1.xpose.msra.mxu0 0.0
      %1109 = vmatprep.subr.mxu0 0.0
      %1110 = vmatpush1.xpose.msra.mxu0 0.0
      %1111 = vmatprep.mubr.f32.mxu0 0.0
      %1112 = vmatmul.mubr.f32.gmra.mrb[0].mxu0 %v1015
      %v1113 = vpop.f32.mrb[0].mxu0
      %v1114 = vadd.f32 0.0, %v1113
      %v1115 = vpop.f32.mrb[0].mxu0
      %1116 = vmatprep.mubr.f32.mxu0 0.0
      %1117 = vmatmul.mubr.f32.gmra.mrb[0].mxu0 %v1017
      %v1118 = vpop.f32.mrb[0].mxu0
      %v1119 = vadd.f32 0.0, %v1118
      %v1120 = vpop.f32.mrb[0].mxu0
      %1121 = vmatprep.mubr.f32.mxu0 0.0
      %1122 = vmatmul.mubr.f32.gmra.mrb[0].mxu0 %v1019
      %v1123 = vpop.f32.mrb[0].mxu0
      %v1124 = vadd.f32 0.0, %v1123
      %v1125 = vpop.f32.mrb[0].mxu0
      %1126 = vmatprep.mubr.f32.mxu0 0.0
      %1127 = vmatmul.mubr.f32.gmra.mrb[0].mxu0 %v1021
      %v1128 = vpop.f32.mrb[0].mxu0
      %v1129 = vadd.f32 0.0, %v1128
      %v1130 = vpop.f32.mrb[0].mxu0
      %1131 = vmatprep.mubr.f32.mxu0 0.0
      %1132 = vmatmul.mubr.f32.gmra.mrb[0].mxu0 %v1023
      %v1133 = vpop.f32.mrb[0].mxu0
      %v1134 = vadd.f32 0.0, %v1133
      %v1135 = vpop.f32.mrb[0].mxu0
      %1136 = vmatprep.mubr.f32.mxu0 0.0
      %1137 = vmatmul.mubr.f32.gmra.mrb[0].mxu0 %v1025
      %v1138 = vpop.f32.mrb[0].mxu0
      %v1139 = vadd.f32 0.0, %v1138
      %v1140 = vpop.f32.mrb[0].mxu0
      %1141 = vmatprep.mubr.f32.mxu0 0.0
      %1142 = vmatmul.mubr.f32.gmra.mrb[0].mxu0 %v1027
      %v1143 = vpop.f32.mrb[0].mxu0
      %v1144 = vadd.f32 0.0, %v1143
      %v1145 = vpop.f32.mrb[0].mxu0
      %1146 = vmatprep.mubr.f32.mxu0 0.0
      %1147 = vmatmul.mubr.f32.gmra.mrb[0].mxu0 %v1029
      %v1148 = vpop.f32.mrb[0].mxu0
      %v1149 = vadd.f32 0.0, %v1148
      %v1150 = vpop.f32.mrb[0].mxu0
      %1151 = vdwg.mxu0
      %v1152 = vsel %vm805, %v1114, -inf
      %1153 = vmax.xlane.f32.xlu0 %v1152
      %v1154 = vpop.xlane.xlu0 %1153
      %v1155 = vsel %vm805, %v1119, -inf
      %1156 = vmax.xlane.f32.xlu0 %v1155
      %v1157 = vpop.xlane.xlu0 %1156
      %v1158 = vsel %vm805, %v1124, -inf
      %1159 = vmax.xlane.f32.xlu0 %v1158
      %v1160 = vpop.xlane.xlu0 %1159
      %v1161 = vsel %vm805, %v1129, -inf
      %1162 = vmax.xlane.f32.xlu0 %v1161
      %v1163 = vpop.xlane.xlu0 %1162
      %v1164 = vsel %vm805, %v1134, -inf
      %1165 = vmax.xlane.f32.xlu0 %v1164
      %v1166 = vpop.xlane.xlu0 %1165
      %v1167 = vsel %vm805, %v1139, -inf
      %1168 = vmax.xlane.f32.xlu0 %v1167
      %v1169 = vpop.xlane.xlu0 %1168
      %v1170 = vsel %vm805, %v1144, -inf
      %1171 = vmax.xlane.f32.xlu0 %v1170
      %v1172 = vpop.xlane.xlu0 %1171
      %v1173 = vsel %vm805, %v1149, -inf
      %1174 = vmax.xlane.f32.xlu0 %v1173
      %v1175 = vpop.xlane.xlu0 %1174
      %v1176 = vsub.f32 %v1114, %v1154
      %v1177 = vsub.f32 %v1119, %v1157
      %v1178 = vsub.f32 %v1124, %v1160
      %v1179 = vsub.f32 %v1129, %v1163
      %v1180 = vsub.f32 %v1134, %v1166
      %v1181 = vsub.f32 %v1139, %v1169
      %v1182 = vsub.f32 %v1144, %v1172
      %v1183 = vsub.f32 %v1149, %v1175
      %v1184 = vmul.f32 %v1176, 1.442695
      %v1185 = vpow.pop %v1184
      %v1186 = vmul.f32 %v1177, 1.442695
      %v1187 = vpow.pop %v1186
      %v1188 = vmul.f32 %v1178, 1.442695
      %v1189 = vpow.pop %v1188
      %v1190 = vmul.f32 %v1179, 1.442695
      %v1191 = vpow.pop %v1190
      %v1192 = vmul.f32 %v1180, 1.442695
      %v1193 = vpow.pop %v1192
      %v1194 = vmul.f32 %v1181, 1.442695
      %v1195 = vpow.pop %v1194
      %v1196 = vmul.f32 %v1182, 1.442695
      %v1197 = vpow.pop %v1196
      %v1198 = vmul.f32 %v1183, 1.442695
      %v1199 = vpow.pop %v1198
      %v1200 = vsel %vm805, %v1185, 0.0
      %1201 = vadd.xlane.f32.xlu0 %v1200
      %v1202 = vpop.xlane.xlu0 %1201
      %v1203 = vsel %vm805, %v1187, 0.0
      %1204 = vadd.xlane.f32.xlu0 %v1203
      %v1205 = vpop.xlane.xlu0 %1204
      %v1206 = vsel %vm805, %v1189, 0.0
      %1207 = vadd.xlane.f32.xlu0 %v1206
      %v1208 = vpop.xlane.xlu0 %1207
      %v1209 = vsel %vm805, %v1191, 0.0
      %1210 = vadd.xlane.f32.xlu0 %v1209
      %v1211 = vpop.xlane.xlu0 %1210
      %v1212 = vsel %vm805, %v1193, 0.0
      %1213 = vadd.xlane.f32.xlu0 %v1212
      %v1214 = vpop.xlane.xlu0 %1213
      %v1215 = vsel %vm805, %v1195, 0.0
      %1216 = vadd.xlane.f32.xlu0 %v1215
      %v1217 = vpop.xlane.xlu0 %1216
      %v1218 = vsel %vm805, %v1197, 0.0
      %1219 = vadd.xlane.f32.xlu0 %v1218
      %v1220 = vpop.xlane.xlu0 %1219
      %v1221 = vsel %vm805, %v1199, 0.0
      %1222 = vadd.xlane.f32.xlu0 %v1221
      %v1223 = vpop.xlane.xlu0 %1222
      %v1224 = vpack.c.bf16 %v1187, %v1185
      %v1225 = vpack.c.bf16 %v1191, %v1189
      %v1226 = vpack.c.bf16 %v1195, %v1193
      %v1227 = vpack.c.bf16 %v1199, %v1197
      %1232 = vrot.lane.b32.xlu0 %v647, 120
      %v1233 = vpop.permute.xlu0 %1232
      %1234 = vrot.lane.b32.xlu0 %v648, 120
      %v1235 = vpop.permute.xlu0 %1234
      %1236 = vrot.lane.b32.xlu0 %v649, 120
      %v1237 = vpop.permute.xlu0 %1236
      %1238 = vrot.lane.b32.xlu0 %v650, 120
      %v1239 = vpop.permute.xlu0 %1238
      %v1245 = vsel %vm805, %v1224, 0
      %v1248 = vsel %vm805, %v1225, 0
      %v1251 = vsel %vm805, %v1226, 0
      %v1254 = vsel %vm805, %v1227, 0
      %1256 = vmatprep.subr.bf16.mxu0 0
      %1257 = vmatpush1.bf16.msra.mxu0 %v1233
      %1258 = vmatprep.subr.bf16.mxu0 0
      %1259 = vmatpush1.bf16.msra.mxu0 %v1235
      %1260 = vmatprep.subr.bf16.mxu0 0
      %1261 = vmatpush1.bf16.msra.mxu0 %v1237
      %1262 = vmatprep.subr.bf16.mxu0 0
      %1263 = vmatpush1.bf16.msra.mxu0 %v1239
      %1264 = vmatprep.subr.bf16.mxu0 0
      %1265 = vmatpush1.bf16.msra.mxu0 0
      %1266 = vmatprep.subr.bf16.mxu0 0
      %1267 = vmatpush1.bf16.msra.mxu0 0
      %1268 = vmatprep.subr.bf16.mxu0 0
      %1269 = vmatpush1.bf16.msra.mxu0 0
      %1270 = vmatprep.subr.bf16.mxu0 0
      %1271 = vmatpush1.bf16.msra.mxu0 0
      %1272 = vmatprep.subr.bf16.mxu0 0
      %1273 = vmatpush1.bf16.msra.mxu0 0
      %1274 = vmatprep.subr.bf16.mxu0 0
      %1275 = vmatpush1.bf16.msra.mxu0 0
      %1276 = vmatprep.subr.bf16.mxu0 0
      %1277 = vmatpush1.bf16.msra.mxu0 0
      %1278 = vmatprep.subr.bf16.mxu0 0
      %1279 = vmatpush1.bf16.msra.mxu0 0
      %1280 = vmatprep.subr.bf16.mxu0 0
      %1281 = vmatpush1.bf16.msra.mxu0 0
      %1282 = vmatprep.subr.bf16.mxu0 0
      %1283 = vmatpush1.bf16.msra.mxu0 0
      %1284 = vmatprep.subr.bf16.mxu0 0
      %1285 = vmatpush1.bf16.msra.mxu0 0
      %1286 = vmatprep.subr.bf16.mxu0 0
      %1287 = vmatpush1.bf16.msra.mxu0 0
      %1288 = vmatprep.mubr.bf16.mxu0 0
      %1289 = vmatmul.mubr.bf16.gmra.mrb[0].mxu0 %v1245
      %v1290 = vpop.f32.mrb[0].mxu0
      %v1291 = vadd.f32 0.0, %v1290
      %v1292 = vpop.f32.mrb[0].mxu0
      %v1293 = vpop.f32.mrb[0].mxu0
      %v1294 = vadd.f32 0.0, %v1293
      %v1295 = vpop.f32.mrb[0].mxu0
      %1296 = vmatprep.mubr.bf16.mxu0 0
      %1297 = vmatmul.mubr.bf16.gmra.mrb[0].mxu0 %v1248
      %v1298 = vpop.f32.mrb[0].mxu0
      %v1299 = vadd.f32 0.0, %v1298
      %v1300 = vpop.f32.mrb[0].mxu0
      %v1301 = vpop.f32.mrb[0].mxu0
      %v1302 = vadd.f32 0.0, %v1301
      %v1303 = vpop.f32.mrb[0].mxu0
      %1304 = vmatprep.mubr.bf16.mxu0 0
      %1305 = vmatmul.mubr.bf16.gmra.mrb[0].mxu0 %v1251
      %v1306 = vpop.f32.mrb[0].mxu0
      %v1307 = vadd.f32 0.0, %v1306
      %v1308 = vpop.f32.mrb[0].mxu0
      %v1309 = vpop.f32.mrb[0].mxu0
      %v1310 = vadd.f32 0.0, %v1309
      %v1311 = vpop.f32.mrb[0].mxu0
      %1312 = vmatprep.mubr.bf16.mxu0 0
      %1313 = vmatmul.mubr.bf16.gmra.mrb[0].mxu0 %v1254
      %v1314 = vpop.f32.mrb[0].mxu0
      %v1315 = vadd.f32 0.0, %v1314
      %v1316 = vpop.f32.mrb[0].mxu0
      %v1317 = vpop.f32.mrb[0].mxu0
      %v1318 = vadd.f32 0.0, %v1317
      %v1319 = vpop.f32.mrb[0].mxu0
      %1320 = vdwg.mxu0
      %v1321 = vrcp.pop %v1202
      %v1322 = vrcp.pop %v1205
      %v1323 = vrcp.pop %v1208
      %v1324 = vrcp.pop %v1211
      %v1325 = vrcp.pop %v1214
      %v1326 = vrcp.pop %v1217
      %v1327 = vrcp.pop %v1220
      %v1328 = vrcp.pop %v1223
      %v1329 = vmul.f32 %v1291, %v1321
      %v1330 = vmul.f32 %v1294, %v1322
      %v1331 = vmul.f32 %v1299, %v1323
      %v1332 = vmul.f32 %v1302, %v1324
      %v1333 = vmul.f32 %v1307, %v1325
      %v1334 = vmul.f32 %v1310, %v1326
      %v1335 = vmul.f32 %v1315, %v1327
      %v1336 = vmul.f32 %v1318, %v1328
      %1345 = vrot.lane.b32.xlu0 %v1329, 8
      %v1346 = vpop.permute.xlu0 %1345
      %1347 = vrot.lane.b32.xlu0 %v1330, 8
      %v1348 = vpop.permute.xlu0 %1347
      %1349 = vrot.lane.b32.xlu0 %v1331, 8
      %v1350 = vpop.permute.xlu0 %1349
      %1351 = vrot.lane.b32.xlu0 %v1332, 8
      %v1352 = vpop.permute.xlu0 %1351
      %1353 = vrot.lane.b32.xlu0 %v1333, 8
      %v1354 = vpop.permute.xlu0 %1353
      %1355 = vrot.lane.b32.xlu0 %v1334, 8
      %v1356 = vpop.permute.xlu0 %1355
      %1357 = vrot.lane.b32.xlu0 %v1335, 8
      %v1358 = vpop.permute.xlu0 %1357
      %1359 = vrot.lane.b32.xlu0 %v1336, 8
      %v1360 = vpop.permute.xlu0 %1359
      %vm1369 = vcmask 130112
      %1370 = vst.msk [vmem:[#allocation2] sm:$0xff] %vm1369, %v1346
      %1371 = vst.msk [vmem:[#allocation2 + $0x8] sm:$0xff] %vm1369, %v1348
      %1372 = vst.msk [vmem:[#allocation2 + $0x10] sm:$0xff] %vm1369, %v1350
      %1373 = vst.msk [vmem:[#allocation2 + $0x18] sm:$0xff] %vm1369, %v1352
      %1374 = vst.msk [vmem:[#allocation2 + $0x20] sm:$0xff] %vm1369, %v1354
      %1375 = vst.msk [vmem:[#allocation2 + $0x28] sm:$0xff] %vm1369, %v1356
      %1376 = vst.msk [vmem:[#allocation2 + $0x30] sm:$0xff] %vm1369, %v1358
      %1377 = vst.msk [vmem:[#allocation2 + $0x38] sm:$0xff] %vm1369, %v1360
      %1378 = vrot.lane.b32.xlu0 %v463, 112
      %v1379 = vpop.permute.xlu0 %1378
      %1380 = vrot.lane.b32.xlu0 %v464, 112
      %v1381 = vpop.permute.xlu0 %1380
      %1382 = vrot.lane.b32.xlu0 %v465, 112
      %v1383 = vpop.permute.xlu0 %1382
      %1384 = vrot.lane.b32.xlu0 %v466, 112
      %v1385 = vpop.permute.xlu0 %1384
      %1386 = vrot.lane.b32.xlu0 %v467, 112
      %v1387 = vpop.permute.xlu0 %1386
      %1388 = vrot.lane.b32.xlu0 %v468, 112
      %v1389 = vpop.permute.xlu0 %1388
      %1390 = vrot.lane.b32.xlu0 %v469, 112
      %v1391 = vpop.permute.xlu0 %1390
      %1392 = vrot.lane.b32.xlu0 %v470, 112
      %v1393 = vpop.permute.xlu0 %1392
      %1394 = vrot.lane.b32.xlu0 %v529, 112
      %v1395 = vpop.permute.xlu0 %1394
      %1396 = vrot.lane.b32.xlu0 %v532, 112
      %v1397 = vpop.permute.xlu0 %1396
      %1398 = vrot.lane.b32.xlu0 %v537, 112
      %v1399 = vpop.permute.xlu0 %1398
      %1400 = vrot.lane.b32.xlu0 %v540, 112
      %v1401 = vpop.permute.xlu0 %1400
      %1402 = vrot.lane.b32.xlu0 %v545, 112
      %v1403 = vpop.permute.xlu0 %1402
      %1404 = vrot.lane.b32.xlu0 %v548, 112
      %v1405 = vpop.permute.xlu0 %1404
      %1406 = vrot.lane.b32.xlu0 %v553, 112
      %v1407 = vpop.permute.xlu0 %1406
      %1408 = vrot.lane.b32.xlu0 %v556, 112
      %v1409 = vpop.permute.xlu0 %1408
      %v1410 = vsel %vm651, %v1379, 0
      %v1412 = vsel %vm651, %v1381, 0
      %v1414 = vsel %vm651, %v1383, 0
      %v1416 = vsel %vm651, %v1385, 0
      %v1418 = vsel %vm651, %v1387, 0
      %v1420 = vsel %vm651, %v1389, 0
      %v1422 = vsel %vm651, %v1391, 0
      %v1424 = vsel %vm651, %v1393, 0
      %v1426 = vsel %vm651, %v1395, 0
      %v1428 = vsel %vm651, %v1397, 0
      %v1430 = vsel %vm651, %v1399, 0
      %v1432 = vsel %vm651, %v1401, 0
      %v1434 = vsel %vm651, %v1403, 0
      %v1436 = vsel %vm651, %v1405, 0
      %v1438 = vsel %vm651, %v1407, 0
      %v1440 = vsel %vm651, %v1409, 0
      %1442 = vmatprep.subr.mxu0 0.0
      %1443 = vmatpush1.xpose.msra.mxu0 %v1426
      %1444 = vmatprep.subr.mxu0 0.0
      %1445 = vmatpush1.xpose.msra.mxu0 %v1428
      %1446 = vmatprep.subr.mxu0 0.0
      %1447 = vmatpush1.xpose.msra.mxu0 %v1430
      %1448 = vmatprep.subr.mxu0 0.0
      %1449 = vmatpush1.xpose.msra.mxu0 %v1432
      %1450 = vmatprep.subr.mxu0 0.0
      %1451 = vmatpush1.xpose.msra.mxu0 %v1434
      %1452 = vmatprep.subr.mxu0 0.0
      %1453 = vmatpush1.xpose.msra.mxu0 %v1436
      %1454 = vmatprep.subr.mxu0 0.0
      %1455 = vmatpush1.xpose.msra.mxu0 %v1438
      %1456 = vmatprep.subr.mxu0 0.0
      %1457 = vmatpush1.xpose.msra.mxu0 %v1440
      %1458 = vmatprep.subr.mxu0 0.0
      %1459 = vmatpush1.xpose.msra.mxu0 0.0
      %1460 = vmatprep.subr.mxu0 0.0
      %1461 = vmatpush1.xpose.msra.mxu0 0.0
      %1462 = vmatprep.subr.mxu0 0.0
      %1463 = vmatpush1.xpose.msra.mxu0 0.0
      %1464 = vmatprep.subr.mxu0 0.0
      %1465 = vmatpush1.xpose.msra.mxu0 0.0
      %1466 = vmatprep.subr.mxu0 0.0
      %1467 = vmatpush1.xpose.msra.mxu0 0.0
      %1468 = vmatprep.subr.mxu0 0.0
      %1469 = vmatpush1.xpose.msra.mxu0 0.0
      %1470 = vmatprep.subr.mxu0 0.0
      %1471 = vmatpush1.xpose.msra.mxu0 0.0
      %1472 = vmatprep.subr.mxu0 0.0
      %1473 = vmatpush1.xpose.msra.mxu0 0.0
      %1474 = vmatprep.subr.mxu0 0.0
      %1475 = vmatpush1.xpose.msra.mxu0 0.0
      %1476 = vmatprep.subr.mxu0 0.0
      %1477 = vmatpush1.xpose.msra.mxu0 0.0
      %1478 = vmatprep.subr.mxu0 0.0
      %1479 = vmatpush1.xpose.msra.mxu0 0.0
      %1480 = vmatprep.subr.mxu0 0.0
      %1481 = vmatpush1.xpose.msra.mxu0 0.0
      %1482 = vmatprep.subr.mxu0 0.0
      %1483 = vmatpush1.xpose.msra.mxu0 0.0
      %1484 = vmatprep.subr.mxu0 0.0
      %1485 = vmatpush1.xpose.msra.mxu0 0.0
      %1486 = vmatprep.subr.mxu0 0.0
      %1487 = vmatpush1.xpose.msra.mxu0 0.0
      %1488 = vmatprep.subr.mxu0 0.0
      %1489 = vmatpush1.xpose.msra.mxu0 0.0
      %1490 = vmatprep.subr.mxu0 0.0
      %1491 = vmatpush1.xpose.msra.mxu0 0.0
      %1492 = vmatprep.subr.mxu0 0.0
      %1493 = vmatpush1.xpose.msra.mxu0 0.0
      %1494 = vmatprep.subr.mxu0 0.0
      %1495 = vmatpush1.xpose.msra.mxu0 0.0
      %1496 = vmatprep.subr.mxu0 0.0
      %1497 = vmatpush1.xpose.msra.mxu0 0.0
      %1498 = vmatprep.subr.mxu0 0.0
      %1499 = vmatpush1.xpose.msra.mxu0 0.0
      %1500 = vmatprep.subr.mxu0 0.0
      %1501 = vmatpush1.xpose.msra.mxu0 0.0
      %1502 = vmatprep.subr.mxu0 0.0
      %1503 = vmatpush1.xpose.msra.mxu0 0.0
      %1504 = vmatprep.subr.mxu0 0.0
      %1505 = vmatpush1.xpose.msra.mxu0 0.0
      %1506 = vmatprep.mubr.f32.mxu0 0.0
      %1507 = vmatmul.mubr.f32.gmra.mrb[0].mxu0 %v1410
      %v1508 = vpop.f32.mrb[0].mxu0
      %v1509 = vadd.f32 0.0, %v1508
      %v1510 = vpop.f32.mrb[0].mxu0
      %1511 = vmatprep.mubr.f32.mxu0 0.0
      %1512 = vmatmul.mubr.f32.gmra.mrb[0].mxu0 %v1412
      %v1513 = vpop.f32.mrb[0].mxu0
      %v1514 = vadd.f32 0.0, %v1513
      %v1515 = vpop.f32.mrb[0].mxu0
      %1516 = vmatprep.mubr.f32.mxu0 0.0
      %1517 = vmatmul.mubr.f32.gmra.mrb[0].mxu0 %v1414
      %v1518 = vpop.f32.mrb[0].mxu0
      %v1519 = vadd.f32 0.0, %v1518
      %v1520 = vpop.f32.mrb[0].mxu0
      %1521 = vmatprep.mubr.f32.mxu0 0.0
      %1522 = vmatmul.mubr.f32.gmra.mrb[0].mxu0 %v1416
      %v1523 = vpop.f32.mrb[0].mxu0
      %v1524 = vadd.f32 0.0, %v1523
      %v1525 = vpop.f32.mrb[0].mxu0
      %1526 = vmatprep.mubr.f32.mxu0 0.0
      %1527 = vmatmul.mubr.f32.gmra.mrb[0].mxu0 %v1418
      %v1528 = vpop.f32.mrb[0].mxu0
      %v1529 = vadd.f32 0.0, %v1528
      %v1530 = vpop.f32.mrb[0].mxu0
      %1531 = vmatprep.mubr.f32.mxu0 0.0
      %1532 = vmatmul.mubr.f32.gmra.mrb[0].mxu0 %v1420
      %v1533 = vpop.f32.mrb[0].mxu0
      %v1534 = vadd.f32 0.0, %v1533
      %v1535 = vpop.f32.mrb[0].mxu0
      %1536 = vmatprep.mubr.f32.mxu0 0.0
      %1537 = vmatmul.mubr.f32.gmra.mrb[0].mxu0 %v1422
      %v1538 = vpop.f32.mrb[0].mxu0
      %v1539 = vadd.f32 0.0, %v1538
      %v1540 = vpop.f32.mrb[0].mxu0
      %1541 = vmatprep.mubr.f32.mxu0 0.0
      %1542 = vmatmul.mubr.f32.gmra.mrb[0].mxu0 %v1424
      %v1543 = vpop.f32.mrb[0].mxu0
      %v1544 = vadd.f32 0.0, %v1543
      %v1545 = vpop.f32.mrb[0].mxu0
      %1546 = vdwg.mxu0
      %v1547 = vsel %vm805, %v1509, -inf
      %1548 = vmax.xlane.f32.xlu0 %v1547
      %v1549 = vpop.xlane.xlu0 %1548
      %v1550 = vsel %vm805, %v1514, -inf
      %1551 = vmax.xlane.f32.xlu0 %v1550
      %v1552 = vpop.xlane.xlu0 %1551
      %v1553 = vsel %vm805, %v1519, -inf
      %1554 = vmax.xlane.f32.xlu0 %v1553
      %v1555 = vpop.xlane.xlu0 %1554
      %v1556 = vsel %vm805, %v1524, -inf
      %1557 = vmax.xlane.f32.xlu0 %v1556
      %v1558 = vpop.xlane.xlu0 %1557
      %v1559 = vsel %vm805, %v1529, -inf
      %1560 = vmax.xlane.f32.xlu0 %v1559
      %v1561 = vpop.xlane.xlu0 %1560
      %v1562 = vsel %vm805, %v1534, -inf
      %1563 = vmax.xlane.f32.xlu0 %v1562
      %v1564 = vpop.xlane.xlu0 %1563
      %v1565 = vsel %vm805, %v1539, -inf
      %1566 = vmax.xlane.f32.xlu0 %v1565
      %v1567 = vpop.xlane.xlu0 %1566
      %v1568 = vsel %vm805, %v1544, -inf
      %1569 = vmax.xlane.f32.xlu0 %v1568
      %v1570 = vpop.xlane.xlu0 %1569
      %v1571 = vsub.f32 %v1509, %v1549
      %v1572 = vsub.f32 %v1514, %v1552
      %v1573 = vsub.f32 %v1519, %v1555
      %v1574 = vsub.f32 %v1524, %v1558
      %v1575 = vsub.f32 %v1529, %v1561
      %v1576 = vsub.f32 %v1534, %v1564
      %v1577 = vsub.f32 %v1539, %v1567
      %v1578 = vsub.f32 %v1544, %v1570
      %v1579 = vmul.f32 %v1571, 1.442695
      %v1580 = vpow.pop %v1579
      %v1581 = vmul.f32 %v1572, 1.442695
      %v1582 = vpow.pop %v1581
      %v1583 = vmul.f32 %v1573, 1.442695
      %v1584 = vpow.pop %v1583
      %v1585 = vmul.f32 %v1574, 1.442695
      %v1586 = vpow.pop %v1585
      %v1587 = vmul.f32 %v1575, 1.442695
      %v1588 = vpow.pop %v1587
      %v1589 = vmul.f32 %v1576, 1.442695
      %v1590 = vpow.pop %v1589
      %v1591 = vmul.f32 %v1577, 1.442695
      %v1592 = vpow.pop %v1591
      %v1593 = vmul.f32 %v1578, 1.442695
      %v1594 = vpow.pop %v1593
      %v1595 = vsel %vm805, %v1580, 0.0
      %1596 = vadd.xlane.f32.xlu0 %v1595
      %v1597 = vpop.xlane.xlu0 %1596
      %v1598 = vsel %vm805, %v1582, 0.0
      %1599 = vadd.xlane.f32.xlu0 %v1598
      %v1600 = vpop.xlane.xlu0 %1599
      %v1601 = vsel %vm805, %v1584, 0.0
      %1602 = vadd.xlane.f32.xlu0 %v1601
      %v1603 = vpop.xlane.xlu0 %1602
      %v1604 = vsel %vm805, %v1586, 0.0
      %1605 = vadd.xlane.f32.xlu0 %v1604
      %v1606 = vpop.xlane.xlu0 %1605
      %v1607 = vsel %vm805, %v1588, 0.0
      %1608 = vadd.xlane.f32.xlu0 %v1607
      %v1609 = vpop.xlane.xlu0 %1608
      %v1610 = vsel %vm805, %v1590, 0.0
      %1611 = vadd.xlane.f32.xlu0 %v1610
      %v1612 = vpop.xlane.xlu0 %1611
      %v1613 = vsel %vm805, %v1592, 0.0
      %1614 = vadd.xlane.f32.xlu0 %v1613
      %v1615 = vpop.xlane.xlu0 %1614
      %v1616 = vsel %vm805, %v1594, 0.0
      %1617 = vadd.xlane.f32.xlu0 %v1616
      %v1618 = vpop.xlane.xlu0 %1617
      %v1619 = vpack.c.bf16 %v1582, %v1580
      %v1620 = vpack.c.bf16 %v1586, %v1584
      %v1621 = vpack.c.bf16 %v1590, %v1588
      %v1622 = vpack.c.bf16 %v1594, %v1592
      %1623 = vrot.lane.b32.xlu0 %v647, 112
      %v1624 = vpop.permute.xlu0 %1623
      %1625 = vrot.lane.b32.xlu0 %v648, 112
      %v1626 = vpop.permute.xlu0 %1625
      %1627 = vrot.lane.b32.xlu0 %v649, 112
      %v1628 = vpop.permute.xlu0 %1627
      %1629 = vrot.lane.b32.xlu0 %v650, 112
      %v1630 = vpop.permute.xlu0 %1629
      %v1636 = vsel %vm805, %v1619, 0
      %v1639 = vsel %vm805, %v1620, 0
      %v1642 = vsel %vm805, %v1621, 0
      %v1645 = vsel %vm805, %v1622, 0
      %1647 = vmatprep.subr.bf16.mxu0 0
      %1648 = vmatpush1.bf16.msra.mxu0 %v1624
      %1649 = vmatprep.subr.bf16.mxu0 0
      %1650 = vmatpush1.bf16.msra.mxu0 %v1626
      %1651 = vmatprep.subr.bf16.mxu0 0
      %1652 = vmatpush1.bf16.msra.mxu0 %v1628
      %1653 = vmatprep.subr.bf16.mxu0 0
      %1654 = vmatpush1.bf16.msra.mxu0 %v1630
      %1655 = vmatprep.subr.bf16.mxu0 0
      %1656 = vmatpush1.bf16.msra.mxu0 0
      %1657 = vmatprep.subr.bf16.mxu0 0
      %1658 = vmatpush1.bf16.msra.mxu0 0
      %1659 = vmatprep.subr.bf16.mxu0 0
      %1660 = vmatpush1.bf16.msra.mxu0 0
      %1661 = vmatprep.subr.bf16.mxu0 0
      %1662 = vmatpush1.bf16.msra.mxu0 0
      %1663 = vmatprep.subr.bf16.mxu0 0
      %1664 = vmatpush1.bf16.msra.mxu0 0
      %1665 = vmatprep.subr.bf16.mxu0 0
      %1666 = vmatpush1.bf16.msra.mxu0 0
      %1667 = vmatprep.subr.bf16.mxu0 0
      %1668 = vmatpush1.bf16.msra.mxu0 0
      %1669 = vmatprep.subr.bf16.mxu0 0
      %1670 = vmatpush1.bf16.msra.mxu0 0
      %1671 = vmatprep.subr.bf16.mxu0 0
      %1672 = vmatpush1.bf16.msra.mxu0 0
      %1673 = vmatprep.subr.bf16.mxu0 0
      %1674 = vmatpush1.bf16.msra.mxu0 0
      %1675 = vmatprep.subr.bf16.mxu0 0
      %1676 = vmatpush1.bf16.msra.mxu0 0
      %1677 = vmatprep.subr.bf16.mxu0 0
      %1678 = vmatpush1.bf16.msra.mxu0 0
      %1679 = vmatprep.mubr.bf16.mxu0 0
      %1680 = vmatmul.mubr.bf16.gmra.mrb[0].mxu0 %v1636
      %v1681 = vpop.f32.mrb[0].mxu0
      %v1682 = vadd.f32 0.0, %v1681
      %v1683 = vpop.f32.mrb[0].mxu0
      %v1684 = vpop.f32.mrb[0].mxu0
      %v1685 = vadd.f32 0.0, %v1684
      %v1686 = vpop.f32.mrb[0].mxu0
      %1687 = vmatprep.mubr.bf16.mxu0 0
      %1688 = vmatmul.mubr.bf16.gmra.mrb[0].mxu0 %v1639
      %v1689 = vpop.f32.mrb[0].mxu0
      %v1690 = vadd.f32 0.0, %v1689
      %v1691 = vpop.f32.mrb[0].mxu0
      %v1692 = vpop.f32.mrb[0].mxu0
      %v1693 = vadd.f32 0.0, %v1692
      %v1694 = vpop.f32.mrb[0].mxu0
      %1695 = vmatprep.mubr.bf16.mxu0 0
      %1696 = vmatmul.mubr.bf16.gmra.mrb[0].mxu0 %v1642
      %v1697 = vpop.f32.mrb[0].mxu0
      %v1698 = vadd.f32 0.0, %v1697
      %v1699 = vpop.f32.mrb[0].mxu0
      %v1700 = vpop.f32.mrb[0].mxu0
      %v1701 = vadd.f32 0.0, %v1700
      %v1702 = vpop.f32.mrb[0].mxu0
      %1703 = vmatprep.mubr.bf16.mxu0 0
      %1704 = vmatmul.mubr.bf16.gmra.mrb[0].mxu0 %v1645
      %v1705 = vpop.f32.mrb[0].mxu0
      %v1706 = vadd.f32 0.0, %v1705
      %v1707 = vpop.f32.mrb[0].mxu0
      %v1708 = vpop.f32.mrb[0].mxu0
      %v1709 = vadd.f32 0.0, %v1708
      %v1710 = vpop.f32.mrb[0].mxu0
      %1711 = vdwg.mxu0
      %v1712 = vrcp.pop %v1597
      %v1713 = vrcp.pop %v1600
      %v1714 = vrcp.pop %v1603
      %v1715 = vrcp.pop %v1606
      %v1716 = vrcp.pop %v1609
      %v1717 = vrcp.pop %v1612
      %v1718 = vrcp.pop %v1615
      %v1719 = vrcp.pop %v1618
      %v1720 = vmul.f32 %v1682, %v1712
      %v1721 = vmul.f32 %v1685, %v1713
      %v1722 = vmul.f32 %v1690, %v1714
      %v1723 = vmul.f32 %v1693, %v1715
      %v1724 = vmul.f32 %v1698, %v1716
      %v1725 = vmul.f32 %v1701, %v1717
      %v1726 = vmul.f32 %v1706, %v1718
      %v1727 = vmul.f32 %v1709, %v1719
      %1736 = vrot.lane.b32.xlu0 %v1720, 16
      %v1737 = vpop.permute.xlu0 %1736
      %1738 = vrot.lane.b32.xlu0 %v1721, 16
      %v1739 = vpop.permute.xlu0 %1738
      %1740 = vrot.lane.b32.xlu0 %v1722, 16
      %v1741 = vpop.permute.xlu0 %1740
      %1742 = vrot.lane.b32.xlu0 %v1723, 16
      %v1743 = vpop.permute.xlu0 %1742
      %1744 = vrot.lane.b32.xlu0 %v1724, 16
      %v1745 = vpop.permute.xlu0 %1744
      %1746 = vrot.lane.b32.xlu0 %v1725, 16
      %v1747 = vpop.permute.xlu0 %1746
      %1748 = vrot.lane.b32.xlu0 %v1726, 16
      %v1749 = vpop.permute.xlu0 %1748
      %1750 = vrot.lane.b32.xlu0 %v1727, 16
      %v1751 = vpop.permute.xlu0 %1750
      %vm1760 = vcmask 195712
      %1761 = vst.msk [vmem:[#allocation2] sm:$0xff] %vm1760, %v1737
      %1762 = vst.msk [vmem:[#allocation2 + $0x8] sm:$0xff] %vm1760, %v1739
      %1763 = vst.msk [vmem:[#allocation2 + $0x10] sm:$0xff] %vm1760, %v1741
      %1764 = vst.msk [vmem:[#allocation2 + $0x18] sm:$0xff] %vm1760, %v1743
      %1765 = vst.msk [vmem:[#allocation2 + $0x20] sm:$0xff] %vm1760, %v1745
      %1766 = vst.msk [vmem:[#allocation2 + $0x28] sm:$0xff] %vm1760, %v1747
      %1767 = vst.msk [vmem:[#allocation2 + $0x30] sm:$0xff] %vm1760, %v1749
      %1768 = vst.msk [vmem:[#allocation2 + $0x38] sm:$0xff] %vm1760, %v1751
      %1769 = vrot.lane.b32.xlu0 %v463, 104
      %v1770 = vpop.permute.xlu0 %1769
      %1771 = vrot.lane.b32.xlu0 %v464, 104
      %v1772 = vpop.permute.xlu0 %1771
      %1773 = vrot.lane.b32.xlu0 %v465, 104
      %v1774 = vpop.permute.xlu0 %1773
      %1775 = vrot.lane.b32.xlu0 %v466, 104
      %v1776 = vpop.permute.xlu0 %1775
      %1777 = vrot.lane.b32.xlu0 %v467, 104
      %v1778 = vpop.permute.xlu0 %1777
      %1779 = vrot.lane.b32.xlu0 %v468, 104
      %v1780 = vpop.permute.xlu0 %1779
      %1781 = vrot.lane.b32.xlu0 %v469, 104
      %v1782 = vpop.permute.xlu0 %1781
      %1783 = vrot.lane.b32.xlu0 %v470, 104
      %v1784 = vpop.permute.xlu0 %1783
      %1785 = vrot.lane.b32.xlu0 %v529, 104
      %v1786 = vpop.permute.xlu0 %1785
      %1787 = vrot.lane.b32.xlu0 %v532, 104
      %v1788 = vpop.permute.xlu0 %1787
      %1789 = vrot.lane.b32.xlu0 %v537, 104
      %v1790 = vpop.permute.xlu0 %1789
      %1791 = vrot.lane.b32.xlu0 %v540, 104
      %v1792 = vpop.permute.xlu0 %1791
      %1793 = vrot.lane.b32.xlu0 %v545, 104
      %v1794 = vpop.permute.xlu0 %1793
      %1795 = vrot.lane.b32.xlu0 %v548, 104
      %v1796 = vpop.permute.xlu0 %1795
      %1797 = vrot.lane.b32.xlu0 %v553, 104
      %v1798 = vpop.permute.xlu0 %1797
      %1799 = vrot.lane.b32.xlu0 %v556, 104
      %v1800 = vpop.permute.xlu0 %1799
      %v1801 = vsel %vm651, %v1770, 0
      %v1803 = vsel %vm651, %v1772, 0
      %v1805 = vsel %vm651, %v1774, 0
      %v1807 = vsel %vm651, %v1776, 0
      %v1809 = vsel %vm651, %v1778, 0
      %v1811 = vsel %vm651, %v1780, 0
      %v1813 = vsel %vm651, %v1782, 0
      %v1815 = vsel %vm651, %v1784, 0
      %v1817 = vsel %vm651, %v1786, 0
      %v1819 = vsel %vm651, %v1788, 0
      %v1821 = vsel %vm651, %v1790, 0
      %v1823 = vsel %vm651, %v1792, 0
      %v1825 = vsel %vm651, %v1794, 0
      %v1827 = vsel %vm651, %v1796, 0
      %v1829 = vsel %vm651, %v1798, 0
      %v1831 = vsel %vm651, %v1800, 0
      %1833 = vmatprep.subr.mxu0 0.0
      %1834 = vmatpush1.xpose.msra.mxu0 %v1817
      %1835 = vmatprep.subr.mxu0 0.0
      %1836 = vmatpush1.xpose.msra.mxu0 %v1819
      %1837 = vmatprep.subr.mxu0 0.0
      %1838 = vmatpush1.xpose.msra.mxu0 %v1821
      %1839 = vmatprep.subr.mxu0 0.0
      %1840 = vmatpush1.xpose.msra.mxu0 %v1823
      %1841 = vmatprep.subr.mxu0 0.0
      %1842 = vmatpush1.xpose.msra.mxu0 %v1825
      %1843 = vmatprep.subr.mxu0 0.0
      %1844 = vmatpush1.xpose.msra.mxu0 %v1827
      %1845 = vmatprep.subr.mxu0 0.0
      %1846 = vmatpush1.xpose.msra.mxu0 %v1829
      %1847 = vmatprep.subr.mxu0 0.0
      %1848 = vmatpush1.xpose.msra.mxu0 %v1831
      %1849 = vmatprep.subr.mxu0 0.0
      %1850 = vmatpush1.xpose.msra.mxu0 0.0
      %1851 = vmatprep.subr.mxu0 0.0
      %1852 = vmatpush1.xpose.msra.mxu0 0.0
      %1853 = vmatprep.subr.mxu0 0.0
      %1854 = vmatpush1.xpose.msra.mxu0 0.0
      %1855 = vmatprep.subr.mxu0 0.0
      %1856 = vmatpush1.xpose.msra.mxu0 0.0
      %1857 = vmatprep.subr.mxu0 0.0
      %1858 = vmatpush1.xpose.msra.mxu0 0.0
      %1859 = vmatprep.subr.mxu0 0.0
      %1860 = vmatpush1.xpose.msra.mxu0 0.0
      %1861 = vmatprep.subr.mxu0 0.0
      %1862 = vmatpush1.xpose.msra.mxu0 0.0
      %1863 = vmatprep.subr.mxu0 0.0
      %1864 = vmatpush1.xpose.msra.mxu0 0.0
      %1865 = vmatprep.subr.mxu0 0.0
      %1866 = vmatpush1.xpose.msra.mxu0 0.0
      %1867 = vmatprep.subr.mxu0 0.0
      %1868 = vmatpush1.xpose.msra.mxu0 0.0
      %1869 = vmatprep.subr.mxu0 0.0
      %1870 = vmatpush1.xpose.msra.mxu0 0.0
      %1871 = vmatprep.subr.mxu0 0.0
      %1872 = vmatpush1.xpose.msra.mxu0 0.0
      %1873 = vmatprep.subr.mxu0 0.0
      %1874 = vmatpush1.xpose.msra.mxu0 0.0
      %1875 = vmatprep.subr.mxu0 0.0
      %1876 = vmatpush1.xpose.msra.mxu0 0.0
      %1877 = vmatprep.subr.mxu0 0.0
      %1878 = vmatpush1.xpose.msra.mxu0 0.0
      %1879 = vmatprep.subr.mxu0 0.0
      %1880 = vmatpush1.xpose.msra.mxu0 0.0
      %1881 = vmatprep.subr.mxu0 0.0
      %1882 = vmatpush1.xpose.msra.mxu0 0.0
      %1883 = vmatprep.subr.mxu0 0.0
      %1884 = vmatpush1.xpose.msra.mxu0 0.0
      %1885 = vmatprep.subr.mxu0 0.0
      %1886 = vmatpush1.xpose.msra.mxu0 0.0
      %1887 = vmatprep.subr.mxu0 0.0
      %1888 = vmatpush1.xpose.msra.mxu0 0.0
      %1889 = vmatprep.subr.mxu0 0.0
      %1890 = vmatpush1.xpose.msra.mxu0 0.0
      %1891 = vmatprep.subr.mxu0 0.0
      %1892 = vmatpush1.xpose.msra.mxu0 0.0
      %1893 = vmatprep.subr.mxu0 0.0
      %1894 = vmatpush1.xpose.msra.mxu0 0.0
      %1895 = vmatprep.subr.mxu0 0.0
      %1896 = vmatpush1.xpose.msra.mxu0 0.0
      %1897 = vmatprep.mubr.f32.mxu0 0.0
      %1898 = vmatmul.mubr.f32.gmra.mrb[0].mxu0 %v1801
      %v1899 = vpop.f32.mrb[0].mxu0
      %v1900 = vadd.f32 0.0, %v1899
      %v1901 = vpop.f32.mrb[0].mxu0
      %1902 = vmatprep.mubr.f32.mxu0 0.0
      %1903 = vmatmul.mubr.f32.gmra.mrb[0].mxu0 %v1803
      %v1904 = vpop.f32.mrb[0].mxu0
      %v1905 = vadd.f32 0.0, %v1904
      %v1906 = vpop.f32.mrb[0].mxu0
      %1907 = vmatprep.mubr.f32.mxu0 0.0
      %1908 = vmatmul.mubr.f32.gmra.mrb[0].mxu0 %v1805
      %v1909 = vpop.f32.mrb[0].mxu0
      %v1910 = vadd.f32 0.0, %v1909
      %v1911 = vpop.f32.mrb[0].mxu0
      %1912 = vmatprep.mubr.f32.mxu0 0.0
      %1913 = vmatmul.mubr.f32.gmra.mrb[0].mxu0 %v1807
      %v1914 = vpop.f32.mrb[0].mxu0
      %v1915 = vadd.f32 0.0, %v1914
      %v1916 = vpop.f32.mrb[0].mxu0
      %1917 = vmatprep.mubr.f32.mxu0 0.0
      %1918 = vmatmul.mubr.f32.gmra.mrb[0].mxu0 %v1809
      %v1919 = vpop.f32.mrb[0].mxu0
      %v1920 = vadd.f32 0.0, %v1919
      %v1921 = vpop.f32.mrb[0].mxu0
      %1922 = vmatprep.mubr.f32.mxu0 0.0
      %1923 = vmatmul.mubr.f32.gmra.mrb[0].mxu0 %v1811
      %v1924 = vpop.f32.mrb[0].mxu0
      %v1925 = vadd.f32 0.0, %v1924
      %v1926 = vpop.f32.mrb[0].mxu0
      %1927 = vmatprep.mubr.f32.mxu0 0.0
      %1928 = vmatmul.mubr.f32.gmra.mrb[0].mxu0 %v1813
      %v1929 = vpop.f32.mrb[0].mxu0
      %v1930 = vadd.f32 0.0, %v1929
      %v1931 = vpop.f32.mrb[0].mxu0
      %1932 = vmatprep.mubr.f32.mxu0 0.0
      %1933 = vmatmul.mubr.f32.gmra.mrb[0].mxu0 %v1815
      %v1934 = vpop.f32.mrb[0].mxu0
      %v1935 = vadd.f32 0.0, %v1934
      %v1936 = vpop.f32.mrb[0].mxu0
      %1937 = vdwg.mxu0
      %v1938 = vsel %vm805, %v1900, -inf
      %1939 = vmax.xlane.f32.xlu0 %v1938
      %v1940 = vpop.xlane.xlu0 %1939
      %v1941 = vsel %vm805, %v1905, -inf
      %1942 = vmax.xlane.f32.xlu0 %v1941
      %v1943 = vpop.xlane.xlu0 %1942
      %v1944 = vsel %vm805, %v1910, -inf
      %1945 = vmax.xlane.f32.xlu0 %v1944
      %v1946 = vpop.xlane.xlu0 %1945
      %v1947 = vsel %vm805, %v1915, -inf
      %1948 = vmax.xlane.f32.xlu0 %v1947
      %v1949 = vpop.xlane.xlu0 %1948
      %v1950 = vsel %vm805, %v1920, -inf
      %1951 = vmax.xlane.f32.xlu0 %v1950
      %v1952 = vpop.xlane.xlu0 %1951
      %v1953 = vsel %vm805, %v1925, -inf
      %1954 = vmax.xlane.f32.xlu0 %v1953
      %v1955 = vpop.xlane.xlu0 %1954
      %v1956 = vsel %vm805, %v1930, -inf
      %1957 = vmax.xlane.f32.xlu0 %v1956
      %v1958 = vpop.xlane.xlu0 %1957
      %v1959 = vsel %vm805, %v1935, -inf
      %1960 = vmax.xlane.f32.xlu0 %v1959
      %v1961 = vpop.xlane.xlu0 %1960
      %v1962 = vsub.f32 %v1900, %v1940
      %v1963 = vsub.f32 %v1905, %v1943
      %v1964 = vsub.f32 %v1910, %v1946
      %v1965 = vsub.f32 %v1915, %v1949
      %v1966 = vsub.f32 %v1920, %v1952
      %v1967 = vsub.f32 %v1925, %v1955
      %v1968 = vsub.f32 %v1930, %v1958
      %v1969 = vsub.f32 %v1935, %v1961
      %v1970 = vmul.f32 %v1962, 1.442695
      %v1971 = vpow.pop %v1970
      %v1972 = vmul.f32 %v1963, 1.442695
      %v1973 = vpow.pop %v1972
      %v1974 = vmul.f32 %v1964, 1.442695
      %v1975 = vpow.pop %v1974
      %v1976 = vmul.f32 %v1965, 1.442695
      %v1977 = vpow.pop %v1976
      %v1978 = vmul.f32 %v1966, 1.442695
      %v1979 = vpow.pop %v1978
      %v1980 = vmul.f32 %v1967, 1.442695
      %v1981 = vpow.pop %v1980
      %v1982 = vmul.f32 %v1968, 1.442695
      %v1983 = vpow.pop %v1982
      %v1984 = vmul.f32 %v1969, 1.442695
      %v1985 = vpow.pop %v1984
      %v1986 = vsel %vm805, %v1971, 0.0
      %1987 = vadd.xlane.f32.xlu0 %v1986
      %v1988 = vpop.xlane.xlu0 %1987
      %v1989 = vsel %vm805, %v1973, 0.0
      %1990 = vadd.xlane.f32.xlu0 %v1989
      %v1991 = vpop.xlane.xlu0 %1990
      %v1992 = vsel %vm805, %v1975, 0.0
      %1993 = vadd.xlane.f32.xlu0 %v1992
      %v1994 = vpop.xlane.xlu0 %1993
      %v1995 = vsel %vm805, %v1977, 0.0
      %1996 = vadd.xlane.f32.xlu0 %v1995
      %v1997 = vpop.xlane.xlu0 %1996
      %v1998 = vsel %vm805, %v1979, 0.0
      %1999 = vadd.xlane.f32.xlu0 %v1998
      %v2000 = vpop.xlane.xlu0 %1999
      %v2001 = vsel %vm805, %v1981, 0.0
      %2002 = vadd.xlane.f32.xlu0 %v2001
      %v2003 = vpop.xlane.xlu0 %2002
      %v2004 = vsel %vm805, %v1983, 0.0
      %2005 = vadd.xlane.f32.xlu0 %v2004
      %v2006 = vpop.xlane.xlu0 %2005
      %v2007 = vsel %vm805, %v1985, 0.0
      %2008 = vadd.xlane.f32.xlu0 %v2007
      %v2009 = vpop.xlane.xlu0 %2008
      %v2010 = vpack.c.bf16 %v1973, %v1971
      %v2011 = vpack.c.bf16 %v1977, %v1975
      %v2012 = vpack.c.bf16 %v1981, %v1979
      %v2013 = vpack.c.bf16 %v1985, %v1983
      %2014 = vrot.lane.b32.xlu0 %v647, 104
      %v2015 = vpop.permute.xlu0 %2014
      %2016 = vrot.lane.b32.xlu0 %v648, 104
      %v2017 = vpop.permute.xlu0 %2016
      %2018 = vrot.lane.b32.xlu0 %v649, 104
      %v2019 = vpop.permute.xlu0 %2018
      %2020 = vrot.lane.b32.xlu0 %v650, 104
      %v2021 = vpop.permute.xlu0 %2020
      %v2027 = vsel %vm805, %v2010, 0
      %v2030 = vsel %vm805, %v2011, 0
      %v2033 = vsel %vm805, %v2012, 0
      %v2036 = vsel %vm805, %v2013, 0
      %2038 = vmatprep.subr.bf16.mxu0 0
      %2039 = vmatpush1.bf16.msra.mxu0 %v2015
      %2040 = vmatprep.subr.bf16.mxu0 0
      %2041 = vmatpush1.bf16.msra.mxu0 %v2017
      %2042 = vmatprep.subr.bf16.mxu0 0
      %2043 = vmatpush1.bf16.msra.mxu0 %v2019
      %2044 = vmatprep.subr.bf16.mxu0 0
      %2045 = vmatpush1.bf16.msra.mxu0 %v2021
      %2046 = vmatprep.subr.bf16.mxu0 0
      %2047 = vmatpush1.bf16.msra.mxu0 0
      %2048 = vmatprep.subr.bf16.mxu0 0
      %2049 = vmatpush1.bf16.msra.mxu0 0
      %2050 = vmatprep.subr.bf16.mxu0 0
      %2051 = vmatpush1.bf16.msra.mxu0 0
      %2052 = vmatprep.subr.bf16.mxu0 0
      %2053 = vmatpush1.bf16.msra.mxu0 0
      %2054 = vmatprep.subr.bf16.mxu0 0
      %2055 = vmatpush1.bf16.msra.mxu0 0
      %2056 = vmatprep.subr.bf16.mxu0 0
      %2057 = vmatpush1.bf16.msra.mxu0 0
      %2058 = vmatprep.subr.bf16.mxu0 0
      %2059 = vmatpush1.bf16.msra.mxu0 0
      %2060 = vmatprep.subr.bf16.mxu0 0
      %2061 = vmatpush1.bf16.msra.mxu0 0
      %2062 = vmatprep.subr.bf16.mxu0 0
      %2063 = vmatpush1.bf16.msra.mxu0 0
      %2064 = vmatprep.subr.bf16.mxu0 0
      %2065 = vmatpush1.bf16.msra.mxu0 0
      %2066 = vmatprep.subr.bf16.mxu0 0
      %2067 = vmatpush1.bf16.msra.mxu0 0
      %2068 = vmatprep.subr.bf16.mxu0 0
      %2069 = vmatpush1.bf16.msra.mxu0 0
      %2070 = vmatprep.mubr.bf16.mxu0 0
      %2071 = vmatmul.mubr.bf16.gmra.mrb[0].mxu0 %v2027
      %v2072 = vpop.f32.mrb[0].mxu0
      %v2073 = vadd.f32 0.0, %v2072
      %v2074 = vpop.f32.mrb[0].mxu0
      %v2075 = vpop.f32.mrb[0].mxu0
      %v2076 = vadd.f32 0.0, %v2075
      %v2077 = vpop.f32.mrb[0].mxu0
      %2078 = vmatprep.mubr.bf16.mxu0 0
      %2079 = vmatmul.mubr.bf16.gmra.mrb[0].mxu0 %v2030
      %v2080 = vpop.f32.mrb[0].mxu0
      %v2081 = vadd.f32 0.0, %v2080
      %v2082 = vpop.f32.mrb[0].mxu0
      %v2083 = vpop.f32.mrb[0].mxu0
      %v2084 = vadd.f32 0.0, %v2083
      %v2085 = vpop.f32.mrb[0].mxu0
      %2086 = vmatprep.mubr.bf16.mxu0 0
      %2087 = vmatmul.mubr.bf16.gmra.mrb[0].mxu0 %v2033
      %v2088 = vpop.f32.mrb[0].mxu0
      %v2089 = vadd.f32 0.0, %v2088
      %v2090 = vpop.f32.mrb[0].mxu0
      %v2091 = vpop.f32.mrb[0].mxu0
      %v2092 = vadd.f32 0.0, %v2091
      %v2093 = vpop.f32.mrb[0].mxu0
      %2094 = vmatprep.mubr.bf16.mxu0 0
      %2095 = vmatmul.mubr.bf16.gmra.mrb[0].mxu0 %v2036
      %v2096 = vpop.f32.mrb[0].mxu0
      %v2097 = vadd.f32 0.0, %v2096
      %v2098 = vpop.f32.mrb[0].mxu0
      %v2099 = vpop.f32.mrb[0].mxu0
      %v2100 = vadd.f32 0.0, %v2099
      %v2101 = vpop.f32.mrb[0].mxu0
      %2102 = vdwg.mxu0
      %v2103 = vrcp.pop %v1988
      %v2104 = vrcp.pop %v1991
      %v2105 = vrcp.pop %v1994
      %v2106 = vrcp.pop %v1997
      %v2107 = vrcp.pop %v2000
      %v2108 = vrcp.pop %v2003
      %v2109 = vrcp.pop %v2006
      %v2110 = vrcp.pop %v2009
      %v2111 = vmul.f32 %v2073, %v2103
      %v2112 = vmul.f32 %v2076, %v2104
      %v2113 = vmul.f32 %v2081, %v2105
      %v2114 = vmul.f32 %v2084, %v2106
      %v2115 = vmul.f32 %v2089, %v2107
      %v2116 = vmul.f32 %v2092, %v2108
      %v2117 = vmul.f32 %v2097, %v2109
      %v2118 = vmul.f32 %v2100, %v2110
      %2127 = vrot.lane.b32.xlu0 %v2111, 24
      %v2128 = vpop.permute.xlu0 %2127
      %2129 = vrot.lane.b32.xlu0 %v2112, 24
      %v2130 = vpop.permute.xlu0 %2129
      %2131 = vrot.lane.b32.xlu0 %v2113, 24
      %v2132 = vpop.permute.xlu0 %2131
      %2133 = vrot.lane.b32.xlu0 %v2114, 24
      %v2134 = vpop.permute.xlu0 %2133
      %2135 = vrot.lane.b32.xlu0 %v2115, 24
      %v2136 = vpop.permute.xlu0 %2135
      %2137 = vrot.lane.b32.xlu0 %v2116, 24
      %v2138 = vpop.permute.xlu0 %2137
      %2139 = vrot.lane.b32.xlu0 %v2117, 24
      %v2140 = vpop.permute.xlu0 %2139
      %2141 = vrot.lane.b32.xlu0 %v2118, 24
      %v2142 = vpop.permute.xlu0 %2141
      %vm2151 = vcmask 261312
      %2152 = vst.msk [vmem:[#allocation2] sm:$0xff] %vm2151, %v2128
      %2153 = vst.msk [vmem:[#allocation2 + $0x8] sm:$0xff] %vm2151, %v2130
      %2154 = vst.msk [vmem:[#allocation2 + $0x10] sm:$0xff] %vm2151, %v2132
      %2155 = vst.msk [vmem:[#allocation2 + $0x18] sm:$0xff] %vm2151, %v2134
      %2156 = vst.msk [vmem:[#allocation2 + $0x20] sm:$0xff] %vm2151, %v2136
      %2157 = vst.msk [vmem:[#allocation2 + $0x28] sm:$0xff] %vm2151, %v2138
      %2158 = vst.msk [vmem:[#allocation2 + $0x30] sm:$0xff] %vm2151, %v2140
      %2159 = vst.msk [vmem:[#allocation2 + $0x38] sm:$0xff] %vm2151, %v2142
      %v2160 = vld [vmem:[#allocation2] sm:$0xff]
      %v2161 = vld [vmem:[#allocation2 + $0x8] sm:$0xff]
      %v2162 = vld [vmem:[#allocation2 + $0x10] sm:$0xff]
      %v2163 = vld [vmem:[#allocation2 + $0x18] sm:$0xff]
      %v2164 = vld [vmem:[#allocation2 + $0x20] sm:$0xff]
      %v2165 = vld [vmem:[#allocation2 + $0x28] sm:$0xff]
      %v2166 = vld [vmem:[#allocation2 + $0x30] sm:$0xff]
      %v2167 = vld [vmem:[#allocation2 + $0x38] sm:$0xff]
      %v2168 = vpack.c.bf16 %v2161, %v2160
      %v2169 = vpack.c.bf16 %v2163, %v2162
      %v2170 = vpack.c.bf16 %v2165, %v2164
      %v2171 = vpack.c.bf16 %v2167, %v2166
      %v2172 = vld [vmem:[%s4] sm:$0xf]
      %v2173 = vld [vmem:[%s4 + $0x4] sm:$0xf]
      %v2174 = vld [vmem:[%s4 + $0x8] sm:$0xf]
      %v2175 = vld [vmem:[%s4 + $0xc] sm:$0xf]
      %v2176 = vld [vmem:[%s8] sm:$0x1]
      %v2178 = vlaneseq
      %v2179 = vshrl.u32 %v2178, 7
      %v2180 = vsub.s32 0, %v2179
      %v2181 = vrot.slane %v2176, %v2180
      %v2187 = vunpack.c.l.b16 %v2172
      %v2188 = vunpack.c.l.b16 %v2173
      %v2189 = vunpack.c.l.b16 %v2174
      %v2190 = vunpack.c.l.b16 %v2175
      %v2191 = vpack.c.b16 %v2188, %v2187
      %v2192 = vpack.c.b16 %v2190, %v2189
      %v2196 = vsel %vm385, %v2168, 0
      %v2199 = vsel %vm385, %v2169, 0
      %v2202 = vsel %vm385, %v2170, 0
      %v2205 = vsel %vm385, %v2171, 0
      %2207 = vmatprep.subr.bf16.mxu0 0
      %2208 = vmatpush1.bf16.msra.mxu0 %v2191
      %2209 = vmatprep.subr.bf16.mxu0 0
      %2210 = vmatpush1.bf16.msra.mxu0 %v2192
      %2211 = vmatprep.subr.bf16.mxu0 0
      %2212 = vmatpush1.bf16.msra.mxu0 0
      %2213 = vmatprep.subr.bf16.mxu0 0
      %2214 = vmatpush1.bf16.msra.mxu0 0
      %2215 = vmatprep.subr.bf16.mxu0 0
      %2216 = vmatpush1.bf16.msra.mxu0 0
      %2217 = vmatprep.subr.bf16.mxu0 0
      %2218 = vmatpush1.bf16.msra.mxu0 0
      %2219 = vmatprep.subr.bf16.mxu0 0
      %2220 = vmatpush1.bf16.msra.mxu0 0
      %2221 = vmatprep.subr.bf16.mxu0 0
      %2222 = vmatpush1.bf16.msra.mxu0 0
      %2223 = vmatprep.subr.bf16.mxu0 0
      %2224 = vmatpush1.bf16.msra.mxu0 0
      %2225 = vmatprep.subr.bf16.mxu0 0
      %2226 = vmatpush1.bf16.msra.mxu0 0
      %2227 = vmatprep.subr.bf16.mxu0 0
      %2228 = vmatpush1.bf16.msra.mxu0 0
      %2229 = vmatprep.subr.bf16.mxu0 0
      %2230 = vmatpush1.bf16.msra.mxu0 0
      %2231 = vmatprep.subr.bf16.mxu0 0
      %2232 = vmatpush1.bf16.msra.mxu0 0
      %2233 = vmatprep.subr.bf16.mxu0 0
      %2234 = vmatpush1.bf16.msra.mxu0 0
      %2235 = vmatprep.subr.bf16.mxu0 0
      %2236 = vmatpush1.bf16.msra.mxu0 0
      %2237 = vmatprep.subr.bf16.mxu0 0
      %2238 = vmatpush1.bf16.msra.mxu0 0
      %2239 = vmatprep.mubr.bf16.mxu0 0
      %2240 = vmatmul.mubr.bf16.gmra.mrb[0].mxu0 %v2196
      %v2241 = vpop.f32.mrb[0].mxu0
      %v2242 = vadd.f32 %v2181, %v2241
      %v2243 = vpop.f32.mrb[0].mxu0
      %v2244 = vpop.f32.mrb[0].mxu0
      %v2245 = vadd.f32 %v2181, %v2244
      %v2246 = vpop.f32.mrb[0].mxu0
      %2247 = vmatprep.mubr.bf16.mxu0 0
      %2248 = vmatmul.mubr.bf16.gmra.mrb[0].mxu0 %v2199
      %v2249 = vpop.f32.mrb[0].mxu0
      %v2250 = vadd.f32 %v2181, %v2249
      %v2251 = vpop.f32.mrb[0].mxu0
      %v2252 = vpop.f32.mrb[0].mxu0
      %v2253 = vadd.f32 %v2181, %v2252
      %v2254 = vpop.f32.mrb[0].mxu0
      %2255 = vmatprep.mubr.bf16.mxu0 0
      %2256 = vmatmul.mubr.bf16.gmra.mrb[0].mxu0 %v2202
      %v2257 = vpop.f32.mrb[0].mxu0
      %v2258 = vadd.f32 %v2181, %v2257
      %v2259 = vpop.f32.mrb[0].mxu0
      %v2260 = vpop.f32.mrb[0].mxu0
      %v2261 = vadd.f32 %v2181, %v2260
      %v2262 = vpop.f32.mrb[0].mxu0
      %2263 = vmatprep.mubr.bf16.mxu0 0
      %2264 = vmatmul.mubr.bf16.gmra.mrb[0].mxu0 %v2205
      %v2265 = vpop.f32.mrb[0].mxu0
      %v2266 = vadd.f32 %v2181, %v2265
      %v2267 = vpop.f32.mrb[0].mxu0
      %v2268 = vpop.f32.mrb[0].mxu0
      %v2269 = vadd.f32 %v2181, %v2268
      %v2270 = vpop.f32.mrb[0].mxu0
      %2271 = vdwg.mxu0
      %2272 = vst.msk [vmem:[%s332] sm:$0xff] %vm385, %v2242
      %2273 = vst.msk [vmem:[%s332 + $0x8] sm:$0xff] %vm385, %v2245
      %2274 = vst.msk [vmem:[%s332 + $0x10] sm:$0xff] %vm385, %v2250
      %2275 = vst.msk [vmem:[%s332 + $0x18] sm:$0xff] %vm385, %v2253
      %2276 = vst.msk [vmem:[%s332 + $0x20] sm:$0xff] %vm385, %v2258
      %2277 = vst.msk [vmem:[%s332 + $0x28] sm:$0xff] %vm385, %v2261
      %2278 = vst.msk [vmem:[%s332 + $0x30] sm:$0xff] %vm385, %v2266
      %2279 = vst.msk [vmem:[%s332 + $0x38] sm:$0xff] %vm385, %v2269
      %p2280 = scmp.lt.s32.totalorder %s20, 1
      %s2281 = scalar_select %p2280, %s20, 1
      %s2282 = smul.addr %s2281, 8
      %s2283 = smul.addr %s2282, 8
      %s2284 = scalar_lea.vmem %s9, %s2283
      // Predicated region
      $region57: #{tpu_custom_call.1} parent=55 // pred_check
        %p2285 = pneg %p232
      $region58: #{tpu_custom_call.1} parent=55 // pred_check_branch
        %2287 = sbr.rel (%p2285) target = $region60
      $region59: #{tpu_custom_call.1} parent=55 // pred_region
        _
      $region60: #{tpu_custom_call.1} parent=55 // pred_fallthru
        _
    $region56: #{tpu_custom_call.1} parent=5 // pred_fallthru
      _
    %p2288 = scmp.le.s32.totalorder 2, %s15
    // Predicated region
    $region61: #{tpu_custom_call.1} parent=5 // pred_check
      %p2289 = pneg %p2288
    $region62: #{tpu_custom_call.1} parent=5 // pred_check_branch
      %2291 = sbr.rel (%p2289) target = $region64
    $region63: #{tpu_custom_call.1} parent=5 // pred_region
      %s2292 = ssub.s32 %s15, 2
      // Predicated region
      $region65: #{tpu_custom_call.1} parent=63 // pred_check
        %p2293 = pneg %p238
      $region66: #{tpu_custom_call.1} parent=63 // pred_check_branch
        %2295 = sbr.rel (%p2293) target = $region68
      $region67: #{tpu_custom_call.1} parent=63 // pred_region
        %p2296 = scmp.lt.s32.totalorder %s21, 1
        %s2297 = scalar_select %p2296, %s21, 1
        %s2298 = smul.addr %s2297, 8
        %s2299 = smul.addr %s2298, 8
        %s2300 = scalar_lea.vmem %s9, %s2299
      $region68: #{tpu_custom_call.1} parent=63 // pred_fallthru
        _
    $region64: #{tpu_custom_call.1} parent=5 // pred_fallthru
      _
  $region6: #{tpu_custom_call.1} parent=0 // loop_footer
    %s19 = sadd.s32 1, %s15
  $region7: #{tpu_custom_call.1} parent=0 // loop_footer_branch
    %14 = sbr.rel target = $region3
  $region8: #{tpu_custom_call.1} parent=0 // loop_exit
    _

</llo_original>
